<compile_context>
chip_gen: v7x
topology: tpu7x:2x2x1
jax: 0.10.0
libtpu: 0.0.40
codegen_flags: <defaults>
</compile_context>

<pallas_src>
import functools

import jax
import jax.numpy as jnp
from jax.experimental import pallas as pl
from jax.experimental.pallas import tpu as pltpu

MAX_GT = 128                        # fixed matched-pair padding (lane-dense)
LOSS_GAIN = {"class": 1.0, "bbox": 5.0, "giou": 2.0}
VFL_ALPHA = 0.75                    # ultralytics VarifocalLoss defaults (gamma=2)
FL_ALPHA, FL_GAMMA = 0.25, 1.5      # ultralytics FocalLoss defaults
_EPS = 1e-7


def _pick_row_tile(n_rows, itemsize, cap_bytes):
    """Whole slab if it fits the per-step budget; otherwise the largest
    multiple-of-8 divisor of n_rows that does."""
    cap_rows = max(8, cap_bytes // (128 * itemsize))
    if n_rows <= cap_rows:
        return n_rows
    t = int(cap_rows // 8) * 8
    while t >= 8:
        if n_rows % t == 0:
            return t
        t -= 8
    return n_rows


# ---------------------------------------------------------------------------
# Fused per-layer kernel (grid = (L, row_tiles); row_tiles == 1 normally)
# ---------------------------------------------------------------------------
def _detr_layer_kernel(scores_ref, xm_ref, pdbox_ref, gtbox_ref, mask_ref,
                       params_ref, out_ref, acc_ref, *, mode):
    r_idx = pl.program_id(1)
    n_r = pl.num_programs(1)

    # ---- "background" classification term over this (rt, 128) logits slab ----
    x = scores_ref[...]                                  # native dtype (f32/bf16)
    e = jnp.exp(-jnp.abs(x))                             # shared transcendental
    softplus = jnp.maximum(x, 0.0) + jnp.log1p(e)        # BCEWithLogits(x, 0)
    if x.dtype == jnp.float32:
        d = 1.0 + e
        r = pl.reciprocal(d, approx=True)
        r = r * (2.0 - d * r)                            # Newton step (VPU, ~free)
        p = jnp.where(x >= 0.0, r, e * r)                # sigmoid(x)
    else:                                                # bf16 path (v6e / v7x)
        p = jnp.where(x >= 0, jnp.ones_like(e), e) / (1.0 + e)

    if mode == "vfl":
        w = VFL_ALPHA * (p * p)                          # VFL, label == 0
    elif mode == "fl":
        w = (1.0 - FL_ALPHA) * (p * jnp.sqrt(p))         # FL, label == 0 (p^1.5)
    else:  # "select": traced num_gts decides VFL (gts > 0) vs FL (gts == 0)
        vfl_on = params_ref[3] > 0.5
        w = jnp.where(vfl_on, VFL_ALPHA * (p * p),
                      (1.0 - FL_ALPHA) * (p * jnp.sqrt(p)))
    bg = softplus * w                                    # (rt, 128)

    @pl.when(r_idx == 0)
    def _init():
        acc_ref[...] = jnp.zeros_like(acc_ref)

    # Column reduction on the otherwise-idle MXU; f32 accumulation.
    ones = jnp.ones((8, bg.shape[0]), dtype=bg.dtype)
    acc_ref[...] += jnp.dot(ones, bg, preferred_element_type=jnp.float32)

    @pl.when(r_idx == n_r - 1)
    def _finalize():
        m = mask_ref[...]                                # (1, MAX_GT) validity
        pd = pdbox_ref[...].astype(jnp.float32)          # (4, MAX_GT) matched pred
        gt = gtbox_ref[...]                              # (4, MAX_GT) matched gt

        l1_sum = jnp.sum(jnp.abs(pd - gt) * m)

        px, py, pw, ph = pd[0:1], pd[1:2], pd[2:3], pd[3:4]
        gx, gy, gw, gh = gt[0:1], gt[1:2], gt[2:3], gt[3:4]
        b1x1, b1x2 = px - pw * 0.5, px + pw * 0.5
        b1y1, b1y2 = py - ph * 0.5, py + ph * 0.5
        b2x1, b2x2 = gx - gw * 0.5, gx + gw * 0.5
        b2y1, b2y2 = gy - gh * 0.5, gy + gh * 0.5
        iw = jnp.maximum(jnp.minimum(b1x2, b2x2) - jnp.maximum(b1x1, b2x1), 0.0)
        ih = jnp.maximum(jnp.minimum(b1y2, b2y2) - jnp.maximum(b1y1, b2y1), 0.0)
        inter = iw * ih
        union = pw * ph + gw * gh - inter + _EPS
        iou = inter / union
        cw = jnp.maximum(b1x2, b2x2) - jnp.minimum(b1x1, b2x1)
        ch = jnp.maximum(b1y2, b2y2) - jnp.minimum(b1y1, b2y1)
        c_area = cw * ch + _EPS
        giou = iou - (c_area - union) / c_area
        giou_sum = jnp.sum((1.0 - giou) * m)

        # ---- matched-pair correction to the classification sum (exact math) --
        # At a matched (b, q, cls) element the VFL loss is BCE(x, iou) * iou; the
        # background sum already counted softplus(x) * alpha * p^2.
        # mask is all-zero when num_gts == 0, so this is a no-op then.
        xm = xm_ref[...].astype(jnp.float32)             # (1, MAX_GT)
        em = jnp.exp(-jnp.abs(xm))
        spm = jnp.maximum(xm, 0.0) + jnp.log1p(em)
        pm = jnp.where(xm >= 0.0, 1.0, em) / (1.0 + em)  # exact sigmoid (tiny path)
        corr = (spm - xm * iou) * iou - spm * (VFL_ALPHA * (pm * pm))
        corr_sum = jnp.sum(corr * m)

        # all 8 acc rows hold identical column sums (ones(8, rt) LHS)
        cls_sum = jnp.sum(acc_ref[0:1, :]) + corr_sum

        # fold the loss gains and 1/max(num_gts, 1) into the store (SMEM scalars)
        lane = jax.lax.broadcasted_iota(jnp.int32, out_ref.shape, 1)
        out_ref[...] = jnp.where(
            lane == 0, cls_sum * params_ref[0],
            jnp.where(lane == 1, l1_sum * params_ref[1],
                      jnp.where(lane == 2, giou_sum * params_ref[2], 0.0)))


# ---------------------------------------------------------------------------
# DETRLoss forward (tiny gather/pad plumbing in JAX, hot path in one kernel)
# ---------------------------------------------------------------------------
def detr_loss_forward(pd_bboxes, pd_scores, gt_cls, gt_bboxes,
                      match_img_idx, match_pd_idx, match_gt_idx,
                      num_gts=None, bboxs_each_img=None, aux_loss=True,
                      use_vfl=True, max_gt=MAX_GT, row_tile_bytes=8 << 20,
                      core_parallel_layers=False):
    """pd_bboxes: (L, B, Q, 4) xywh; pd_scores: (L, B, Q, nc) logits.

    `num_gts` may be a Python int (exact static torch semantics) or a traced
    int scalar (varying GT counts do not retrace under jit)."""
    L, B, Q, C = pd_scores.shape
    if num_gts is None:
        num_gts = int(sum(bboxs_each_img))
    static_gts = isinstance(num_gts, int)

    if not use_vfl and (not static_gts or num_gts > 0):
        # TODO(synk): FocalLoss-with-matches (use_vfl=False) variant not implemented.
        raise NotImplementedError("only the default use_fl=True / use_vfl=True config")
    mode = ("vfl" if (num_gts > 0 and use_vfl) else "fl") if static_gts else "select"

    # --- scalars: validity mask / normalization / VFL-vs-FL switch ------------
    gts_i = jnp.asarray(num_gts, jnp.int32)
    inv_den = 1.0 / jnp.maximum(jnp.asarray(num_gts, jnp.float32), 1.0)
    mask = (jnp.arange(max_gt, dtype=jnp.int32) < gts_i
            ).astype(jnp.float32)[None, :]                            # (1, MAX_GT)
    vfl_sel = (gts_i > 0).astype(jnp.float32) if use_vfl else jnp.float32(0.0)
    params = jnp.stack([LOSS_GAIN["class"] * inv_den,
                        LOSS_GAIN["bbox"] * inv_den,
                        LOSS_GAIN["giou"] * inv_den,
                        vfl_sel]).astype(jnp.float32)                 # (4,) -> SMEM

    # --- matched pairs, padded to a fixed MAX_GT (validity carried by mask) ---
    match_img_idx = jnp.asarray(match_img_idx, jnp.int32)
    match_pd_idx = jnp.asarray(match_pd_idx, jnp.int32)
    match_gt_idx = jnp.asarray(match_gt_idx, jnp.int32)
    gt_cls = jnp.asarray(gt_cls, jnp.int32)
    gt_bboxes = jnp.asarray(gt_bboxes, jnp.float32)
    n_match = int(match_img_idx.shape[0])
    n_gt_in = int(gt_cls.shape[0])
    assert n_match <= max_gt and n_gt_in <= max_gt, "increase MAX_GT"
    img_idx = jnp.pad(match_img_idx, (0, max_gt - n_match))
    pd_idx = jnp.pad(match_pd_idx, (0, max_gt - n_match))
    gt_idx = jnp.pad(match_gt_idx, (0, max_gt - n_match))
    gt_cls_p = jnp.pad(gt_cls, (0, max_gt - n_gt_in))
    gt_box_p = jnp.pad(gt_bboxes, ((0, max_gt - n_gt_in), (0, 0)))

    # TODO(synk): these small gathers could move in-kernel via scalar-prefetched
    # SMEM indices; they touch only MAX_GT elements per layer and stay in XLA.
    cls_match = gt_cls_p[gt_idx]                                      # (MAX_GT,)
    gt_assigned = jnp.transpose(gt_box_p[gt_idx], (1, 0))             # (4, MAX_GT)
    pd_assigned = jnp.transpose(pd_bboxes[:, img_idx, pd_idx, :],
                                (0, 2, 1)).astype(jnp.float32)        # (L,4,MAX_GT)
    x_match = pd_scores[:, img_idx, pd_idx, cls_match
                        ][:, None, :].astype(jnp.float32)             # (L,1,MAX_GT)

    # --- lane-dense logits slab: free reshape, no class padding ---------------
    n_el = B * Q * C
    if n_el % 128 == 0:
        scores = pd_scores.reshape(L, n_el // 128, 128)
    else:  # rare fallback: pad flat tail with a large negative (bg loss == 0)
        pad = -(-n_el // 128) * 128 - n_el
        scores = jnp.pad(pd_scores.reshape(L, n_el), ((0, 0), (0, pad)),
                         constant_values=-1e4).reshape(L, -1, 128)
    n_rows = scores.shape[1]
    itemsize = jnp.dtype(scores.dtype).itemsize
    rt = _pick_row_tile(n_rows, itemsize, row_tile_bytes)
    n_rt = n_rows // rt
    block_bytes = rt * 128 * itemsize
    vmem_limit = int(min(max(4 * block_bytes + (4 << 20), 24 << 20), 56 << 20))

    layer_sem = pltpu.CORE_PARALLEL if core_parallel_layers else "parallel"
    kernel = functools.partial(_detr_layer_kernel, mode=mode)
    out = pl.pallas_call(
        kernel,
        out_shape=jax.ShapeDtypeStruct((L, 1, 128), jnp.float32),
        grid=(L, n_rt),
        in_specs=[
            pl.BlockSpec((None, rt, 128), lambda l, r: (l, r, 0)),    # logits slab
            pl.BlockSpec((None, 1, max_gt), lambda l, r: (l, 0, 0)),  # matched logits
            pl.BlockSpec((None, 4, max_gt), lambda l, r: (l, 0, 0)),  # matched pd box
            pl.BlockSpec((4, max_gt), lambda l, r: (0, 0)),           # matched gt box
            pl.BlockSpec((1, max_gt), lambda l, r: (0, 0)),           # validity mask
            pl.BlockSpec(memory_space=pltpu.MemorySpace.SMEM),        # scales/flags
        ],
        out_specs=pl.BlockSpec((None, 1, 128), lambda l, r: (l, 0, 0)),
        scratch_shapes=[pltpu.VMEM((8, 128), jnp.float32)],
        compiler_params=pltpu.CompilerParams(
            dimension_semantics=(layer_sem, "arbitrary"),
            vmem_limit_bytes=vmem_limit),
    )(scores, x_match, pd_assigned, gt_assigned, mask, params)

    # scaling (gains, 1/max(num_gts,1)) already applied inside the kernel
    loss_class, loss_bbox, loss_giou = out[:, 0, 0], out[:, 0, 1], out[:, 0, 2]
    losses = {"loss_class": loss_class[-1],
              "loss_bbox": loss_bbox[-1],
              "loss_giou": loss_giou[-1]}
    if aux_loss:
        losses["loss_class_aux"] = jnp.sum(loss_class[:-1])
        losses["loss_bbox_aux"] = jnp.sum(loss_bbox[:-1])
        losses["loss_giou_aux"] = jnp.sum(loss_giou[:-1])
    return losses


if __name__ == "__main__":
    key = jax.random.PRNGKey(0)
    L, B, Q, nc = 3, 2, 256, 80
    k1, k2, k3, k4 = jax.random.split(key, 4)

    pd_bboxes = jax.random.uniform(k1, (L, B, Q, 4), jnp.float32, 0.05, 0.95)
    pd_scores = jax.random.normal(k2, (L, B, Q, nc), jnp.float32)
    # (On v6e/v7x pass bf16 logits for ~2x HBM and EUP/VPU savings; keep f32 on v5e.)

    gt_cls = jax.random.randint(k3, (6,), 0, nc, dtype=jnp.int32)
    gt_bboxes = jax.random.uniform(k4, (6, 4), jnp.float32, 0.05, 0.95)

    # TODO(synk): HungarianMatcher has no clean Pallas equivalent; fixed match
    # indices are supplied (torch module's `match_indices` kwarg bypasses it).
    match_img_idx = jnp.array([0, 0, 0, 1, 1, 1], jnp.int32)
    match_pd_idx = jnp.array([2, 5, 9, 1, 7, 12], jnp.int32)
    match_gt_idx = jnp.array([1, 0, 2, 4, 3, 5], jnp.int32)
    num_gts = jnp.asarray(6, jnp.int32)   # traced: GT-count changes don't retrace

    loss_fn = jax.jit(functools.partial(detr_loss_forward, aux_loss=True))
    losses = loss_fn(pd_bboxes, pd_scores, gt_cls, gt_bboxes,
                     match_img_idx, match_pd_idx, match_gt_idx, num_gts=num_gts)
    jax.block_until_ready(losses)
    print("KERNEL_OK")
</pallas_src>

<mosaic_0001>
module attributes {stable_mosaic.version = 11 : i64} {
  func.func @_detr_layer_kernel(%arg0: i32, %arg1: i32, %arg2: memref<1x320x128xf32, #tpu.memory_space<vmem>>, %arg3: memref<1x1x128xf32, #tpu.memory_space<vmem>>, %arg4: memref<1x4x128xf32, #tpu.memory_space<vmem>>, %arg5: memref<4x128xf32, #tpu.memory_space<vmem>>, %arg6: memref<1x128xf32, #tpu.memory_space<vmem>>, %arg7: memref<4xf32, #tpu.memory_space<smem>>, %arg8: memref<1x1x128xf32, #tpu.memory_space<vmem>>, %arg9: memref<8x128xf32, #tpu.memory_space<vmem>>) attributes {dimension_semantics = [#tpu.dimension_semantics<parallel>, #tpu.dimension_semantics<arbitrary>], iteration_bounds = array<i64: 3, 1>, scalar_prefetch = 0 : i64, scratch_operands = 1 : i64, tpu.core_type = #tpu.core_type<tc>, window_params = [{transform_indices = @transform_0, window_bounds = array<i64: 1, 320, 128>}, {transform_indices = @transform_1, window_bounds = array<i64: 1, 1, 128>}, {transform_indices = @transform_2, window_bounds = array<i64: 1, 4, 128>}, {pipeline_mode = #tpu.pipeline_mode<synchronous>, transform_indices = @transform_3, window_bounds = array<i64: 4, 128>}, {pipeline_mode = #tpu.pipeline_mode<synchronous>, transform_indices = @transform_4, window_bounds = array<i64: 1, 128>}, {transform_indices = @transform_5, window_bounds = array<i64: 4>}, {transform_indices = @transform_6, window_bounds = array<i64: 1, 1, 128>}]} {
    %c0 = arith.constant 0 : index
    %c0_0 = arith.constant 0 : index
    %c0_1 = arith.constant 0 : index
    %0 = vector.load %arg2[%c0, %c0_0, %c0_1] : memref<1x320x128xf32, #tpu.memory_space<vmem>>, vector<1x320x128xf32>
    %1 = vector.shape_cast %0 : vector<1x320x128xf32> to vector<320x128xf32>
    %2 = math.absf %1 : vector<320x128xf32>
    %cst = arith.constant 0.000000e+00 : f32
    %3 = vector.broadcast %cst : f32 to vector<320x128xf32>
    %4 = arith.subf %3, %2 : vector<320x128xf32>
    %5 = math.exp %4 : vector<320x128xf32>
    %cst_2 = arith.constant 0.000000e+00 : f32
    %6 = vector.broadcast %cst_2 : f32 to vector<320x128xf32>
    %7 = arith.maximumf %1, %6 : vector<320x128xf32>
    %8 = math.log1p %5 : vector<320x128xf32>
    %9 = arith.addf %7, %8 : vector<320x128xf32>
    %cst_3 = arith.constant 1.000000e+00 : f32
    %10 = vector.broadcast %cst_3 : f32 to vector<320x128xf32>
    %11 = arith.addf %10, %5 : vector<320x128xf32>
    %12 = tpu.reciprocal %11 {approx = true} : vector<320x128xf32> -> vector<320x128xf32>
    %13 = arith.mulf %11, %12 : vector<320x128xf32>
    %cst_4 = arith.constant 2.000000e+00 : f32
    %14 = vector.broadcast %cst_4 : f32 to vector<320x128xf32>
    %15 = arith.subf %14, %13 : vector<320x128xf32>
    %16 = arith.mulf %12, %15 : vector<320x128xf32>
    %cst_5 = arith.constant 0.000000e+00 : f32
    %17 = vector.broadcast %cst_5 : f32 to vector<320x128xf32>
    %18 = arith.cmpf oge, %1, %17 : vector<320x128xf32>
    %19 = arith.mulf %5, %16 : vector<320x128xf32>
    %20 = arith.select %18, %16, %19 : vector<320x128xi1>, vector<320x128xf32>
    %c3 = arith.constant 3 : index
    %21 = memref.load %arg7[%c3] : memref<4xf32, #tpu.memory_space<smem>>
    %cst_6 = arith.constant 5.000000e-01 : f32
    %22 = arith.cmpf ogt, %21, %cst_6 : f32
    %23 = arith.mulf %20, %20 : vector<320x128xf32>
    %cst_7 = arith.constant 7.500000e-01 : f32
    %24 = vector.broadcast %cst_7 : f32 to vector<320x128xf32>
    %25 = arith.mulf %24, %23 : vector<320x128xf32>
    %26 = math.sqrt %20 : vector<320x128xf32>
    %27 = arith.mulf %20, %26 : vector<320x128xf32>
    %cst_8 = arith.constant 7.500000e-01 : f32
    %28 = vector.broadcast %cst_8 : f32 to vector<320x128xf32>
    %29 = arith.mulf %28, %27 : vector<320x128xf32>
    %30 = arith.select %22, %25, %29 : vector<320x128xf32>
    %31 = arith.mulf %9, %30 : vector<320x128xf32>
    %c0_i32 = arith.constant 0 : i32
    %32 = arith.cmpi eq, %arg1, %c0_i32 : i32
    %33 = arith.extui %32 : i1 to i32
    %c0_i32_9 = arith.constant 0 : i32
    %34 = arith.cmpi ne, %33, %c0_i32_9 : i32
    scf.if %34 {
      %cst_18 = arith.constant 0.000000e+00 : f32
      %43 = vector.broadcast %cst_18 : f32 to vector<8x128xf32>
      %c0_19 = arith.constant 0 : index
      %c0_20 = arith.constant 0 : index
      %44 = vector.load %arg9[%c0_19, %c0_20] : memref<8x128xf32, #tpu.memory_space<vmem>>, vector<8x128xf32>
      tpu.vector_store %arg9[%c0_19, %c0_20], %43 {strides = array<i32>} : memref<8x128xf32, #tpu.memory_space<vmem>>, vector<8x128xf32>,
    } else {
    }
    %cst_10 = arith.constant 1.000000e+00 : f32
    %35 = vector.broadcast %cst_10 : f32 to vector<8x320xf32>
    %c0_11 = arith.constant 0 : index
    %c0_12 = arith.constant 0 : index
    %36 = vector.load %arg9[%c0_11, %c0_12] : memref<8x128xf32, #tpu.memory_space<vmem>>, vector<8x128xf32>
    %cst_13 = arith.constant dense<0.000000e+00> : vector<8x128xf32>
    %37 = tpu.matmul %35, %31, %cst_13 {dimension_numbers = #tpu.dot_dimension_numbers<[1], [0], [0], [1], [0, 0, 1, 1], [], []>} : vector<8x320xf32>, vector<320x128xf32>, vector<8x128xf32> -> vector<8x128xf32>
    %38 = arith.addf %36, %37 : vector<8x128xf32>
    %c0_14 = arith.constant 0 : index
    %c0_15 = arith.constant 0 : index
    %39 = vector.load %arg9[%c0_14, %c0_15] : memref<8x128xf32, #tpu.memory_space<vmem>>, vector<8x128xf32>
    tpu.vector_store %arg9[%c0_14, %c0_15], %38 {strides = array<i32>} : memref<8x128xf32, #tpu.memory_space<vmem>>, vector<8x128xf32>,
    %c0_i32_16 = arith.constant 0 : i32
    %40 = arith.cmpi eq, %arg1, %c0_i32_16 : i32
    %41 = arith.extui %40 : i1 to i32
    %c0_i32_17 = arith.constant 0 : i32
    %42 = arith.cmpi ne, %41, %c0_i32_17 : i32
    scf.if %42 {
      %c0_18 = arith.constant 0 : index
      %c0_19 = arith.constant 0 : index
      %43 = vector.load %arg6[%c0_18, %c0_19] : memref<1x128xf32, #tpu.memory_space<vmem>>, vector<1x128xf32>
      %c0_20 = arith.constant 0 : index
      %c0_21 = arith.constant 0 : index
      %c0_22 = arith.constant 0 : index
      %44 = vector.load %arg4[%c0_20, %c0_21, %c0_22] : memref<1x4x128xf32, #tpu.memory_space<vmem>>, vector<1x4x128xf32>
      %45 = vector.shape_cast %44 : vector<1x4x128xf32> to vector<4x128xf32>
      %c0_23 = arith.constant 0 : index
      %c0_24 = arith.constant 0 : index
      %46 = vector.load %arg5[%c0_23, %c0_24] : memref<4x128xf32, #tpu.memory_space<vmem>>, vector<4x128xf32>
      %47 = arith.subf %45, %46 : vector<4x128xf32>
      %48 = math.absf %47 : vector<4x128xf32>
      %49 = vector.broadcast %43 : vector<1x128xf32> to vector<4x128xf32>
      %50 = arith.mulf %48, %49 : vector<4x128xf32>
      %51 = vector.shape_cast %50 : vector<4x128xf32> to vector<1x4x128xf32>
      %cst_25 = arith.constant dense<0.000000e+00> : vector<1xf32>
      %52 = vector.multi_reduction <add>, %51, %cst_25 [1, 2] : vector<1x4x128xf32> to vector<1xf32>
      %53 = vector.shape_cast %52 : vector<1xf32> to vector<1x1x1xf32>
      %54 = vector.extract %53[0, 0, 0] : f32 from vector<1x1x1xf32>
      %55 = vector.extract_strided_slice %45 {offsets = [0, 0], sizes = [1, 128], strides = [1, 1]} : vector<4x128xf32> to vector<1x128xf32>
      %56 = vector.extract_strided_slice %45 {offsets = [1, 0], sizes = [1, 128], strides = [1, 1]} : vector<4x128xf32> to vector<1x128xf32>
      %57 = vector.extract_strided_slice %45 {offsets = [2, 0], sizes = [1, 128], strides = [1, 1]} : vector<4x128xf32> to vector<1x128xf32>
      %58 = vector.extract_strided_slice %45 {offsets = [3, 0], sizes = [1, 128], strides = [1, 1]} : vector<4x128xf32> to vector<1x128xf32>
      %59 = vector.extract_strided_slice %46 {offsets = [0, 0], sizes = [1, 128], strides = [1, 1]} : vector<4x128xf32> to vector<1x128xf32>
      %60 = vector.extract_strided_slice %46 {offsets = [1, 0], sizes = [1, 128], strides = [1, 1]} : vector<4x128xf32> to vector<1x128xf32>
      %61 = vector.extract_strided_slice %46 {offsets = [2, 0], sizes = [1, 128], strides = [1, 1]} : vector<4x128xf32> to vector<1x128xf32>
      %62 = vector.extract_strided_slice %46 {offsets = [3, 0], sizes = [1, 128], strides = [1, 1]} : vector<4x128xf32> to vector<1x128xf32>
      %cst_26 = arith.constant 5.000000e-01 : f32
      %63 = vector.broadcast %cst_26 : f32 to vector<1x128xf32>
      %64 = arith.mulf %57, %63 : vector<1x128xf32>
      %65 = arith.subf %55, %64 : vector<1x128xf32>
      %cst_27 = arith.constant 5.000000e-01 : f32
      %66 = vector.broadcast %cst_27 : f32 to vector<1x128xf32>
      %67 = arith.mulf %57, %66 : vector<1x128xf32>
      %68 = arith.addf %55, %67 : vector<1x128xf32>
      %cst_28 = arith.constant 5.000000e-01 : f32
      %69 = vector.broadcast %cst_28 : f32 to vector<1x128xf32>
      %70 = arith.mulf %58, %69 : vector<1x128xf32>
      %71 = arith.subf %56, %70 : vector<1x128xf32>
      %cst_29 = arith.constant 5.000000e-01 : f32
      %72 = vector.broadcast %cst_29 : f32 to vector<1x128xf32>
      %73 = arith.mulf %58, %72 : vector<1x128xf32>
      %74 = arith.addf %56, %73 : vector<1x128xf32>
      %cst_30 = arith.constant 5.000000e-01 : f32
      %75 = vector.broadcast %cst_30 : f32 to vector<1x128xf32>
      %76 = arith.mulf %61, %75 : vector<1x128xf32>
      %77 = arith.subf %59, %76 : vector<1x128xf32>
      %cst_31 = arith.constant 5.000000e-01 : f32
      %78 = vector.broadcast %cst_31 : f32 to vector<1x128xf32>
      %79 = arith.mulf %61, %78 : vector<1x128xf32>
      %80 = arith.addf %59, %79 : vector<1x128xf32>
      %cst_32 = arith.constant 5.000000e-01 : f32
      %81 = vector.broadcast %cst_32 : f32 to vector<1x128xf32>
      %82 = arith.mulf %62, %81 : vector<1x128xf32>
      %83 = arith.subf %60, %82 : vector<1x128xf32>
      %cst_33 = arith.constant 5.000000e-01 : f32
      %84 = vector.broadcast %cst_33 : f32 to vector<1x128xf32>
      %85 = arith.mulf %62, %84 : vector<1x128xf32>
      %86 = arith.addf %60, %85 : vector<1x128xf32>
      %87 = arith.minimumf %68, %80 : vector<1x128xf32>
      %88 = arith.maximumf %65, %77 : vector<1x128xf32>
      %89 = arith.subf %87, %88 : vector<1x128xf32>
      %cst_34 = arith.constant 0.000000e+00 : f32
      %90 = vector.broadcast %cst_34 : f32 to vector<1x128xf32>
      %91 = arith.maximumf %89, %90 : vector<1x128xf32>
      %92 = arith.minimumf %74, %86 : vector<1x128xf32>
      %93 = arith.maximumf %71, %83 : vector<1x128xf32>
      %94 = arith.subf %92, %93 : vector<1x128xf32>
      %cst_35 = arith.constant 0.000000e+00 : f32
      %95 = vector.broadcast %cst_35 : f32 to vector<1x128xf32>
      %96 = arith.maximumf %94, %95 : vector<1x128xf32>
      %97 = arith.mulf %91, %96 : vector<1x128xf32>
      %98 = arith.mulf %57, %58 : vector<1x128xf32>
      %99 = arith.mulf %61, %62 : vector<1x128xf32>
      %100 = arith.addf %98, %99 : vector<1x128xf32>
      %101 = arith.subf %100, %97 : vector<1x128xf32>
      %cst_36 = arith.constant 1.000000e-07 : f32
      %102 = vector.broadcast %cst_36 : f32 to vector<1x128xf32>
      %103 = arith.addf %101, %102 : vector<1x128xf32>
      %104 = arith.divf %97, %103 : vector<1x128xf32>
      %105 = arith.maximumf %68, %80 : vector<1x128xf32>
      %106 = arith.minimumf %65, %77 : vector<1x128xf32>
      %107 = arith.subf %105, %106 : vector<1x128xf32>
      %108 = arith.maximumf %74, %86 : vector<1x128xf32>
      %109 = arith.minimumf %71, %83 : vector<1x128xf32>
      %110 = arith.subf %108, %109 : vector<1x128xf32>
      %111 = arith.mulf %107, %110 : vector<1x128xf32>
      %cst_37 = arith.constant 1.000000e-07 : f32
      %112 = vector.broadcast %cst_37 : f32 to vector<1x128xf32>
      %113 = arith.addf %111, %112 : vector<1x128xf32>
      %114 = arith.subf %113, %103 : vector<1x128xf32>
      %115 = arith.divf %114, %113 : vector<1x128xf32>
      %116 = arith.subf %104, %115 : vector<1x128xf32>
      %cst_38 = arith.constant 1.000000e+00 : f32
      %117 = vector.broadcast %cst_38 : f32 to vector<1x128xf32>
      %118 = arith.subf %117, %116 : vector<1x128xf32>
      %119 = arith.mulf %118, %43 : vector<1x128xf32>
      %120 = vector.shape_cast %119 : vector<1x128xf32> to vector<1x1x128xf32>
      %cst_39 = arith.constant dense<0.000000e+00> : vector<1xf32>
      %121 = vector.multi_reduction <add>, %120, %cst_39 [1, 2] : vector<1x1x128xf32> to vector<1xf32>
      %122 = vector.shape_cast %121 : vector<1xf32> to vector<1x1x1xf32>
      %123 = vector.extract %122[0, 0, 0] : f32 from vector<1x1x1xf32>
      %c0_40 = arith.constant 0 : index
      %c0_41 = arith.constant 0 : index
      %c0_42 = arith.constant 0 : index
      %124 = vector.load %arg3[%c0_40, %c0_41, %c0_42] : memref<1x1x128xf32, #tpu.memory_space<vmem>>, vector<1x1x128xf32>
      %125 = vector.shape_cast %124 : vector<1x1x128xf32> to vector<1x128xf32>
      %126 = math.absf %125 : vector<1x128xf32>
      %cst_43 = arith.constant 0.000000e+00 : f32
      %127 = vector.broadcast %cst_43 : f32 to vector<1x128xf32>
      %128 = arith.subf %127, %126 : vector<1x128xf32>
      %129 = math.exp %128 : vector<1x128xf32>
      %cst_44 = arith.constant 0.000000e+00 : f32
      %130 = vector.broadcast %cst_44 : f32 to vector<1x128xf32>
      %131 = arith.maximumf %125, %130 : vector<1x128xf32>
      %132 = math.log1p %129 : vector<1x128xf32>
      %133 = arith.addf %131, %132 : vector<1x128xf32>
      %cst_45 = arith.constant 0.000000e+00 : f32
      %134 = vector.broadcast %cst_45 : f32 to vector<1x128xf32>
      %135 = arith.cmpf oge, %125, %134 : vector<1x128xf32>
      %cst_46 = arith.constant 1.000000e+00 : f32
      %136 = vector.broadcast %cst_46 : f32 to vector<1x128xf32>
      %137 = arith.select %135, %136, %129 : vector<1x128xi1>, vector<1x128xf32>
      %cst_47 = arith.constant 1.000000e+00 : f32
      %138 = vector.broadcast %cst_47 : f32 to vector<1x128xf32>
      %139 = arith.addf %138, %129 : vector<1x128xf32>
      %140 = arith.divf %137, %139 : vector<1x128xf32>
      %141 = arith.mulf %125, %104 : vector<1x128xf32>
      %142 = arith.subf %133, %141 : vector<1x128xf32>
      %143 = arith.mulf %142, %104 : vector<1x128xf32>
      %144 = arith.mulf %140, %140 : vector<1x128xf32>
      %cst_48 = arith.constant 7.500000e-01 : f32
      %145 = vector.broadcast %cst_48 : f32 to vector<1x128xf32>
      %146 = arith.mulf %145, %144 : vector<1x128xf32>
      %147 = arith.mulf %133, %146 : vector<1x128xf32>
      %148 = arith.subf %143, %147 : vector<1x128xf32>
      %149 = arith.mulf %148, %43 : vector<1x128xf32>
      %150 = vector.shape_cast %149 : vector<1x128xf32> to vector<1x1x128xf32>
      %cst_49 = arith.constant dense<0.000000e+00> : vector<1xf32>
      %151 = vector.multi_reduction <add>, %150, %cst_49 [1, 2] : vector<1x1x128xf32> to vector<1xf32>
      %152 = vector.shape_cast %151 : vector<1xf32> to vector<1x1x1xf32>
      %153 = vector.extract %152[0, 0, 0] : f32 from vector<1x1x1xf32>
      %c0_50 = arith.constant 0 : index
      %c0_51 = arith.constant 0 : index
      %154 = vector.load %arg9[%c0_50, %c0_51] : memref<8x128xf32, #tpu.memory_space<vmem>>, vector<1x128xf32>
      %155 = vector.shape_cast %154 : vector<1x128xf32> to vector<1x1x128xf32>
      %cst_52 = arith.constant dense<0.000000e+00> : vector<1xf32>
      %156 = vector.multi_reduction <add>, %155, %cst_52 [1, 2] : vector<1x1x128xf32> to vector<1xf32>
      %157 = vector.shape_cast %156 : vector<1xf32> to vector<1x1x1xf32>
      %158 = vector.extract %157[0, 0, 0] : f32 from vector<1x1x1xf32>
      %159 = arith.addf %158, %153 : f32
      %160 = tpu.iota {dimensions = array<i32: 1>} : vector<1x128xi32>
      %c0_i32_53 = arith.constant 0 : i32
      %161 = vector.broadcast %c0_i32_53 : i32 to vector<1x128xi32>
      %162 = arith.cmpi eq, %160, %161 : vector<1x128xi32>
      %c0_54 = arith.constant 0 : index
      %163 = memref.load %arg7[%c0_54] : memref<4xf32, #tpu.memory_space<smem>>
      %164 = arith.mulf %159, %163 : f32
      %c1_i32 = arith.constant 1 : i32
      %165 = vector.broadcast %c1_i32 : i32 to vector<1x128xi32>
      %166 = arith.cmpi eq, %160, %165 : vector<1x128xi32>
      %c1 = arith.constant 1 : index
      %167 = memref.load %arg7[%c1] : memref<4xf32, #tpu.memory_space<smem>>
      %168 = arith.mulf %54, %167 : f32
      %c2_i32 = arith.constant 2 : i32
      %169 = vector.broadcast %c2_i32 : i32 to vector<1x128xi32>
      %170 = arith.cmpi eq, %160, %169 : vector<1x128xi32>
      %c2 = arith.constant 2 : index
      %171 = memref.load %arg7[%c2] : memref<4xf32, #tpu.memory_space<smem>>
      %172 = arith.mulf %123, %171 : f32
      %cst_55 = arith.constant 0.000000e+00 : f32
      %173 = vector.broadcast %172 : f32 to vector<1x128xf32>
      %174 = vector.broadcast %cst_55 : f32 to vector<1x128xf32>
      %175 = arith.select %170, %173, %174 : vector<1x128xi1>, vector<1x128xf32>
      %176 = vector.broadcast %168 : f32 to vector<1x128xf32>
      %177 = arith.select %166, %176, %175 : vector<1x128xi1>, vector<1x128xf32>
      %178 = vector.broadcast %164 : f32 to vector<1x128xf32>
      %179 = arith.select %162, %178, %177 : vector<1x128xi1>, vector<1x128xf32>
      %c0_56 = arith.constant 0 : index
      %c0_57 = arith.constant 0 : index
      %c0_58 = arith.constant 0 : index
      %180 = vector.load %arg8[%c0_56, %c0_57, %c0_58] : memref<1x1x128xf32, #tpu.memory_space<vmem>>, vector<1x1x128xf32>
      %181 = vector.shape_cast %180 : vector<1x1x128xf32> to vector<1x128xf32>
      %182 = vector.shape_cast %179 : vector<1x128xf32> to vector<1x1x128xf32>
      tpu.vector_store %arg8[%c0_56, %c0_57, %c0_58], %182 {strides = array<i32>} : memref<1x1x128xf32, #tpu.memory_space<vmem>>, vector<1x1x128xf32>,
    } else {
    }
    return
  }
  func.func @transform_0(%arg0: i32, %arg1: i32) -> (i32, i32, i32) {
    %c0_i32 = arith.constant 0 : i32
    %c0_i32_0 = arith.constant 0 : i32
    return %arg0, %arg1, %c0_i32 : i32, i32, i32
  }
  func.func @transform_1(%arg0: i32, %arg1: i32) -> (i32, i32, i32) {
    %c0_i32 = arith.constant 0 : i32
    %c0_i32_0 = arith.constant 0 : i32
    %c0_i32_1 = arith.constant 0 : i32
    return %arg0, %c0_i32, %c0_i32_0 : i32, i32, i32
  }
  func.func @transform_2(%arg0: i32, %arg1: i32) -> (i32, i32, i32) {
    %c0_i32 = arith.constant 0 : i32
    %c0_i32_0 = arith.constant 0 : i32
    %c0_i32_1 = arith.constant 0 : i32
    return %arg0, %c0_i32, %c0_i32_0 : i32, i32, i32
  }
  func.func @transform_3(%arg0: i32, %arg1: i32) -> (i32, i32) {
    %c0_i32 = arith.constant 0 : i32
    %c0_i32_0 = arith.constant 0 : i32
    %c0_i32_1 = arith.constant 0 : i32
    return %c0_i32, %c0_i32_0 : i32, i32
  }
  func.func @transform_4(%arg0: i32, %arg1: i32) -> (i32, i32) {
    %c0_i32 = arith.constant 0 : i32
    %c0_i32_0 = arith.constant 0 : i32
    %c0_i32_1 = arith.constant 0 : i32
    return %c0_i32, %c0_i32_0 : i32, i32
  }
  func.func @transform_5(%arg0: i32, %arg1: i32) -> i32 {
    %c0_i32 = arith.constant 0 : i32
    %c0_i32_0 = arith.constant 0 : i32
    return %c0_i32 : i32
  }
  func.func @transform_6(%arg0: i32, %arg1: i32) -> (i32, i32, i32) {
    %c0_i32 = arith.constant 0 : i32
    %c0_i32_0 = arith.constant 0 : i32
    %c0_i32_1 = arith.constant 0 : i32
    return %arg0, %c0_i32, %c0_i32_0 : i32, i32, i32
  }
}

</mosaic_0001>

<llo_original>
// kernel: detr_loss_forward.1
$region0: #{detr_loss_forward.1}
  #allocation0 [shape = 'u32[]', space=smem, size = 0x4, offset = 0x4, fixed_abs, tag = 'smem constant byte address 0x4 - core index']
  #allocation1 [shape = 'u32[144,128]{1,0:T(1,128)}', space=vmem, size = 0x12000, scoped, tag = 'internal scratch']
  #allocation2 [shape = 'f32[8,128]{1,0:T(8,128)}', space=vmem, size = 0x1000, scoped, tag = 'scratch operand']
  %s0 = inlined_call_operand.vmem [shape: f32[3,320,128], index: 0, kind: input, shape index: {}]
  %s1 = inlined_call_operand.vmem [shape: f32[3,1,128], index: 1, kind: input, shape index: {}]
  %s2 = inlined_call_operand.vmem [shape: f32[3,4,128], index: 2, kind: input, shape index: {}]
  %s3 = inlined_call_operand.vmem [shape: f32[4,128], index: 3, kind: input, shape index: {}]
  %s4 = inlined_call_operand.vmem [shape: f32[1,128], index: 4, kind: input, shape index: {}]
  %s5 = inlined_call_operand.vmem [shape: f32[4], index: 5, kind: input, shape index: {}]
  %s6 = inlined_call_operand.vmem [shape: f32[3,1,128], index: 6, kind: output, shape index: {}]
  %s7 = sld [smem:[#allocation0]]
  $region69: #{detr_loss_forward.1} parent=0
    _
  %s9 = ssub.s32 1, %s7
  %s10 = scalar_select 0, %s9, %s7
  $region1: #{detr_loss_forward.1} parent=0
    #allocation3 [shape = 'u8[512]{0}', space=smem, size = 0x200, scoped, tag = 'input window, operand 5, single buffered']
    #allocation4 [shape = 's32[2]{0}', space=sflag, size = 0x8, scoped, tag = 'scoped memory for detr_loss_forward.1']
    %11 = vsyncpa [#allocation4], 0
    loop: start=0, step=1, limit=5
    $region2: #{detr_loss_forward.1} parent=1 // loop_pre_header
      _
    $region3: #{detr_loss_forward.1} parent=1 // loop_header
      %s13 = sphi 0, %s17
      %p14 = scmp.ge.s32.totalorder %s13, 5
      %s20 = sphi 0, %s32
      %s21 = sphi 0, %s28
      %s22 = sphi 0, %s20
      %s23 = sphi 0, %s21
      %s24 = sphi 0, %s22
      %s25 = sphi 0, %s23
      %s37 = sphi 0, %s39
      %s40 = sphi 0, %s37
      %s41 = sphi 0, %s40
      %s57 = sphi 0, %s41
      %s63 = sphi 0, %s65
      %s66 = sphi 0, %s63
      %s67 = sphi 0, %s66
      %s83 = sphi 0, %s67
      %s89 = sphi 0, %s91
      %s92 = sphi 0, %s89
      %s93 = sphi 0, %s92
      %s109 = sphi 0, %s93
      %s113 = sphi 0, %s113
      %s115 = sphi 0, %s113
      %s116 = sphi 0, %s115
      %s130 = sphi 0, %s116
      %s134 = sphi 0, %s134
      %s136 = sphi 0, %s134
      %s137 = sphi 0, %s136
      %s151 = sphi 0, %s137
      %s155 = sphi 0, %s155
      %s157 = sphi 0, %s155
      %s158 = sphi 0, %s157
      %s172 = sphi 0, %s158
      %s178 = sphi 0, %s180
      %s181 = sphi 0, %s178
      %s182 = sphi 0, %s181
      %s198 = sphi 0, %s182
    $region4: #{detr_loss_forward.1} parent=1 // loop_header_branch
      %16 = sbr.rel (%p14) target = $region8
    $region5: #{detr_loss_forward.1} parent=1 // loop_body
      %s18 = ssub.s32 %s13, 1
      %s19 = ssub.s32 %s13, 2
      %s26 = sadd.s32 1, %s21
      %p27 = scmp.ge.s32.totalorder %s26, 1
      %s28 = scalar_select %p27, 0, %s26
      %s29 = sadd.s32 1, %s20
      %s30 = scalar_select %p27, %s29, %s20
      %p31 = scmp.ge.s32.totalorder %s30, 3
      %s32 = scalar_select %p31, 0, %s30
      %s33 = ssub.s32 %s20, %s32
      %s34 = ssub.s32 %s21, %s28
      %s35 = sor.u32 %s33, %s34
      %p36 = scmp.eq.s32.totalorder %s35, 0
      %s38 = sadd.s32 %s37, 1
      %s39 = scalar_select %p36, %s37, %s38
      %p42 = pneg %p36
      %p43 = scmp.eq.s32.totalorder %s13, 2
      %p44 = por %p42, %p43
      %p45 = scmp.ne.s32.totalorder %s37, %s40
      %p46 = scmp.eq.s32.totalorder %s13, 0
      %p47 = por %p45, %p46
      %p48 = scmp.ne.s32.totalorder %s37, %s40
      %p49 = scmp.eq.s32.totalorder %s18, 2
      %p50 = por %p48, %p49
      %p51 = scmp.ne.s32.totalorder %s40, %s41
      %p52 = scmp.eq.s32.totalorder %s18, 0
      %p53 = por %p51, %p52
      %p54 = scmp.ne.s32.totalorder %s40, %s41
      %p55 = scmp.eq.s32.totalorder %s19, 2
      %p56 = por %p54, %p55
      %p58 = scmp.ne.s32.totalorder %s41, %s57
      %p59 = scmp.eq.s32.totalorder %s19, 0
      %p60 = por %p58, %p59
      %s61 = ssub.s32 %s20, %s32
      %p62 = scmp.eq.s32.totalorder %s61, 0
      %s64 = sadd.s32 %s63, 1
      %s65 = scalar_select %p62, %s63, %s64
      %p68 = pneg %p62
      %p69 = scmp.eq.s32.totalorder %s13, 2
      %p70 = por %p68, %p69
      %p71 = scmp.ne.s32.totalorder %s63, %s66
      %p72 = scmp.eq.s32.totalorder %s13, 0
      %p73 = por %p71, %p72
      %p74 = scmp.ne.s32.totalorder %s63, %s66
      %p75 = scmp.eq.s32.totalorder %s18, 2
      %p76 = por %p74, %p75
      %p77 = scmp.ne.s32.totalorder %s66, %s67
      %p78 = scmp.eq.s32.totalorder %s18, 0
      %p79 = por %p77, %p78
      %p80 = scmp.ne.s32.totalorder %s66, %s67
      %p81 = scmp.eq.s32.totalorder %s19, 2
      %p82 = por %p80, %p81
      %p84 = scmp.ne.s32.totalorder %s67, %s83
      %p85 = scmp.eq.s32.totalorder %s19, 0
      %p86 = por %p84, %p85
      %s87 = ssub.s32 %s20, %s32
      %p88 = scmp.eq.s32.totalorder %s87, 0
      %s90 = sadd.s32 %s89, 1
      %s91 = scalar_select %p88, %s89, %s90
      %p94 = pneg %p88
      %p95 = scmp.eq.s32.totalorder %s13, 2
      %p96 = por %p94, %p95
      %p97 = scmp.ne.s32.totalorder %s89, %s92
      %p98 = scmp.eq.s32.totalorder %s13, 0
      %p99 = por %p97, %p98
      %p100 = scmp.ne.s32.totalorder %s89, %s92
      %p101 = scmp.eq.s32.totalorder %s18, 2
      %p102 = por %p100, %p101
      %p103 = scmp.ne.s32.totalorder %s92, %s93
      %p104 = scmp.eq.s32.totalorder %s18, 0
      %p105 = por %p103, %p104
      %p106 = scmp.ne.s32.totalorder %s92, %s93
      %p107 = scmp.eq.s32.totalorder %s19, 2
      %p108 = por %p106, %p107
      %p110 = scmp.ne.s32.totalorder %s93, %s109
      %p111 = scmp.eq.s32.totalorder %s19, 0
      %p112 = por %p110, %p111
      %s114 = sadd.s32 %s113, 1
      %p117 = scmp.eq.s32.totalorder %s13, 2
      %p118 = scmp.ne.s32.totalorder %s113, %s115
      %p119 = scmp.eq.s32.totalorder %s13, 0
      %p120 = por %p118, %p119
      %p121 = scmp.ne.s32.totalorder %s113, %s115
      %p122 = scmp.eq.s32.totalorder %s18, 2
      %p123 = por %p121, %p122
      %p124 = scmp.ne.s32.totalorder %s115, %s116
      %p125 = scmp.eq.s32.totalorder %s18, 0
      %p126 = por %p124, %p125
      %p127 = scmp.ne.s32.totalorder %s115, %s116
      %p128 = scmp.eq.s32.totalorder %s19, 2
      %p129 = por %p127, %p128
      %p131 = scmp.ne.s32.totalorder %s116, %s130
      %p132 = scmp.eq.s32.totalorder %s19, 0
      %p133 = por %p131, %p132
      %s135 = sadd.s32 %s134, 1
      %p138 = scmp.eq.s32.totalorder %s13, 2
      %p139 = scmp.ne.s32.totalorder %s134, %s136
      %p140 = scmp.eq.s32.totalorder %s13, 0
      %p141 = por %p139, %p140
      %p142 = scmp.ne.s32.totalorder %s134, %s136
      %p143 = scmp.eq.s32.totalorder %s18, 2
      %p144 = por %p142, %p143
      %p145 = scmp.ne.s32.totalorder %s136, %s137
      %p146 = scmp.eq.s32.totalorder %s18, 0
      %p147 = por %p145, %p146
      %p148 = scmp.ne.s32.totalorder %s136, %s137
      %p149 = scmp.eq.s32.totalorder %s19, 2
      %p150 = por %p148, %p149
      %p152 = scmp.ne.s32.totalorder %s137, %s151
      %p153 = scmp.eq.s32.totalorder %s19, 0
      %p154 = por %p152, %p153
      %s156 = sadd.s32 %s155, 1
      %p159 = scmp.eq.s32.totalorder %s13, 2
      %p160 = scmp.ne.s32.totalorder %s155, %s157
      %p161 = scmp.eq.s32.totalorder %s13, 0
      %p162 = por %p160, %p161
      %p163 = scmp.ne.s32.totalorder %s155, %s157
      %p164 = scmp.eq.s32.totalorder %s18, 2
      %p165 = por %p163, %p164
      %p166 = scmp.ne.s32.totalorder %s157, %s158
      %p167 = scmp.eq.s32.totalorder %s18, 0
      %p168 = por %p166, %p167
      %p169 = scmp.ne.s32.totalorder %s157, %s158
      %p170 = scmp.eq.s32.totalorder %s19, 2
      %p171 = por %p169, %p170
      %p173 = scmp.ne.s32.totalorder %s158, %s172
      %p174 = scmp.eq.s32.totalorder %s19, 0
      %p175 = por %p173, %p174
      %s176 = ssub.s32 %s20, %s32
      %p177 = scmp.eq.s32.totalorder %s176, 0
      %s179 = sadd.s32 %s178, 1
      %s180 = scalar_select %p177, %s178, %s179
      %p183 = pneg %p177
      %p184 = scmp.eq.s32.totalorder %s13, 2
      %p185 = por %p183, %p184
      %p186 = scmp.ne.s32.totalorder %s178, %s181
      %p187 = scmp.eq.s32.totalorder %s13, 0
      %p188 = por %p186, %p187
      %p189 = scmp.ne.s32.totalorder %s178, %s181
      %p190 = scmp.eq.s32.totalorder %s18, 2
      %p191 = por %p189, %p190
      %p192 = scmp.ne.s32.totalorder %s181, %s182
      %p193 = scmp.eq.s32.totalorder %s18, 0
      %p194 = por %p192, %p193
      %p195 = scmp.ne.s32.totalorder %s181, %s182
      %p196 = scmp.eq.s32.totalorder %s19, 2
      %p197 = por %p195, %p196
      %p199 = scmp.ne.s32.totalorder %s182, %s198
      %p200 = scmp.eq.s32.totalorder %s19, 0
      %p201 = por %p199, %p200
      %p202 = scmp.le.s32.totalorder 1, %s13
      %p203 = scmp.lt.s32.totalorder %s13, 4
      %p204 = pnand %p202, %p203
      %p205 = pneg %p204
      // Predicated region
      $region9: #{detr_loss_forward.1} parent=5 // pred_check
        _
      $region10: #{detr_loss_forward.1} parent=5 // pred_check_branch
        %207 = sbr.rel (%p204) target = $region12
      $region11: #{detr_loss_forward.1} parent=5 // pred_region
        %s208 = ssub.s32 %s13, 1
        // Predicated region
        $region13: #{detr_loss_forward.1} parent=11 // pred_check
          %p209 = pneg %p126
        $region14: #{detr_loss_forward.1} parent=11 // pred_check_branch
          %211 = sbr.rel (%p209) target = $region16
        $region15: #{detr_loss_forward.1} parent=11 // pred_region
          _
        $region16: #{detr_loss_forward.1} parent=11 // pred_fallthru
          _
        // Predicated region
        $region17: #{detr_loss_forward.1} parent=11 // pred_check
          %p212 = pneg %p147
        $region18: #{detr_loss_forward.1} parent=11 // pred_check_branch
          %214 = sbr.rel (%p212) target = $region20
        $region19: #{detr_loss_forward.1} parent=11 // pred_region
          _
        $region20: #{detr_loss_forward.1} parent=11 // pred_fallthru
          _
        // Predicated region
        $region21: #{detr_loss_forward.1} parent=11 // pred_check
          %p215 = pneg %p168
        $region22: #{detr_loss_forward.1} parent=11 // pred_check_branch
          %217 = sbr.rel (%p215) target = $region24
        $region23: #{detr_loss_forward.1} parent=11 // pred_region
          %s219 = ssub.s32 16, 16
          %220 = vsyncadd [#allocation4], %s219
          %s222 = sshll.u32 %s5, 4
          %s223 = int_to_ptr.vmem [resolvable:$true] %s222
          %225 = dma.vmem_to_smem %s223, 16, [#allocation3], [#allocation4]
        $region24: #{detr_loss_forward.1} parent=11 // pred_fallthru
          _
      $region12: #{detr_loss_forward.1} parent=5 // pred_fallthru
        _
      %p226 = scmp.lt.s32.totalorder %s13, 3
      // Predicated region
      $region25: #{detr_loss_forward.1} parent=5 // pred_check
        %p227 = pneg %p226
      $region26: #{detr_loss_forward.1} parent=5 // pred_check_branch
        %229 = sbr.rel (%p227) target = $region28
      $region27: #{detr_loss_forward.1} parent=5 // pred_region
        // Predicated region
        $region29: #{detr_loss_forward.1} parent=27 // pred_check
          %p230 = pneg %p47
        $region30: #{detr_loss_forward.1} parent=27 // pred_check_branch
          %232 = sbr.rel (%p230) target = $region32
        $region31: #{detr_loss_forward.1} parent=27 // pred_region
          %s233 = smul.u32 40, %s21
          %p234 = scmp.lt.s32.totalorder %s20, 2
          %s235 = scalar_select %p234, %s20, 2
          %p236 = scmp.lt.s32.totalorder %s233, 39
          %s237 = scalar_select %p236, %s233, 39
          %s238 = smul.addr %s235, 40
          %s239 = sadd.s32 %s237, %s238
          %s240 = smul.addr %s239, 8
          %s241 = scalar_lea.vmem %s0, %s240
          %s242 = smul.u32 40, %s21
        $region32: #{detr_loss_forward.1} parent=27 // pred_fallthru
          _
        // Predicated region
        $region33: #{detr_loss_forward.1} parent=27 // pred_check
          %p243 = pneg %p73
        $region34: #{detr_loss_forward.1} parent=27 // pred_check_branch
          %245 = sbr.rel (%p243) target = $region36
        $region35: #{detr_loss_forward.1} parent=27 // pred_region
          %p246 = scmp.lt.s32.totalorder %s20, 2
          %s247 = scalar_select %p246, %s20, 2
          %s248 = scalar_lea.vmem %s1, %s247
        $region36: #{detr_loss_forward.1} parent=27 // pred_fallthru
          _
        // Predicated region
        $region37: #{detr_loss_forward.1} parent=27 // pred_check
          %p249 = pneg %p99
        $region38: #{detr_loss_forward.1} parent=27 // pred_check_branch
          %251 = sbr.rel (%p249) target = $region40
        $region39: #{detr_loss_forward.1} parent=27 // pred_region
          %p252 = scmp.lt.s32.totalorder %s20, 2
          %s253 = scalar_select %p252, %s20, 2
          %s254 = smul.addr %s253, 4
          %s255 = scalar_lea.vmem %s2, %s254
        $region40: #{detr_loss_forward.1} parent=27 // pred_fallthru
          _
      $region28: #{detr_loss_forward.1} parent=5 // pred_fallthru
        _
      %p256 = scmp.le.s32.totalorder 1, %s13
      %p257 = scmp.lt.s32.totalorder %s13, 4
      %p258 = pnand %p256, %p257
      %p259 = pneg %p258
      // Predicated region
      $region41: #{detr_loss_forward.1} parent=5 // pred_check
        _
      $region42: #{detr_loss_forward.1} parent=5 // pred_check_branch
        %261 = sbr.rel (%p258) target = $region44
      $region43: #{detr_loss_forward.1} parent=5 // pred_region
        %s262 = ssub.s32 %s13, 1
        // Predicated region
        $region45: #{detr_loss_forward.1} parent=43 // pred_check
          %p263 = pneg %p168
        $region46: #{detr_loss_forward.1} parent=43 // pred_check_branch
          %265 = sbr.rel (%p263) target = $region48
        $region47: #{detr_loss_forward.1} parent=43 // pred_region
          %266 = dma.done [#allocation4], 16
        $region48: #{detr_loss_forward.1} parent=43 // pred_fallthru
          _
        %267 = sfence
        %s268 = smul.u32 40, %s23
        %p269 = scmp.lt.s32.totalorder %s22, 2
        %s270 = scalar_select %p269, %s22, 2
        %p271 = scmp.lt.s32.totalorder %s268, 39
        %s272 = scalar_select %p271, %s268, 39
        %s273 = smul.addr %s270, 40
        %s274 = sadd.s32 %s272, %s273
        %s275 = smul.addr %s274, 8
        %s276 = scalar_lea.vmem %s0, %s275
        %p277 = pneg %p53
        %p278 = pneg %p50
        %p279 = scmp.lt.s32.totalorder %s22, 2
        %s280 = scalar_select %p279, %s22, 2
        %s281 = scalar_lea.vmem %s1, %s280
        %p282 = pneg %p79
        %p283 = pneg %p76
        %p284 = scmp.lt.s32.totalorder %s22, 2
        %s285 = scalar_select %p284, %s22, 2
        %s286 = smul.addr %s285, 4
        %s287 = scalar_lea.vmem %s2, %s286
        %p288 = pneg %p105
        %p289 = pneg %p102
        %p290 = pneg %p126
        %p291 = pneg %p123
        %p292 = pneg %p147
        %p293 = pneg %p144
        %p294 = pneg %p168
        %p295 = pneg %p165
        %p296 = pneg %p194
        %p297 = pneg %p191
        %p298 = scmp.lt.s32.totalorder %s22, 2
        %s299 = scalar_select %p298, %s22, 2
        %s300 = scalar_lea.vmem %s6, %s299
        %s301 = smul.u32 40, %s23
        %p302 = scmp.lt.s32.totalorder %s22, 2
        %s303 = scalar_select %p302, %s22, 2
        %p304 = scmp.lt.s32.totalorder %s301, 39
        %s305 = scalar_select %p304, %s301, 39
        %s306 = smul.addr %s303, 40
        %s307 = sadd.s32 %s305, %s306
        %s308 = smul.addr %s307, 8
        %s309 = scalar_lea.vmem %s0, %s308
        %s310 = smul.u32 40, %s23
        %p311 = scmp.lt.s32.totalorder %s22, 2
        %s312 = scalar_select %p311, %s22, 2
        %s313 = scalar_lea.vmem %s1, %s312
        %p314 = scmp.lt.s32.totalorder %s22, 2
        %s315 = scalar_select %p314, %s22, 2
        %s316 = smul.addr %s315, 4
        %s317 = scalar_lea.vmem %s2, %s316
        %p318 = scmp.lt.s32.totalorder %s22, 2
        %s319 = scalar_select %p318, %s22, 2
        %s320 = scalar_lea.vmem %s6, %s319
        %v321 = vld [vmem:[%s309] sm:$0xff]
        %v322 = vld [vmem:[%s309 + $0x8] sm:$0xff]
        %v323 = vld [vmem:[%s309 + $0x10] sm:$0xff]
        %v324 = vld [vmem:[%s309 + $0x18] sm:$0xff]
        %v325 = vld [vmem:[%s309 + $0x20] sm:$0xff]
        %v326 = vld [vmem:[%s309 + $0x28] sm:$0xff]
        %v327 = vld [vmem:[%s309 + $0x30] sm:$0xff]
        %v328 = vld [vmem:[%s309 + $0x38] sm:$0xff]
        %v329 = vld [vmem:[%s309 + $0x40] sm:$0xff]
        %v330 = vld [vmem:[%s309 + $0x48] sm:$0xff]
        %v331 = vld [vmem:[%s309 + $0x50] sm:$0xff]
        %v332 = vld [vmem:[%s309 + $0x58] sm:$0xff]
        %v333 = vld [vmem:[%s309 + $0x60] sm:$0xff]
        %v334 = vld [vmem:[%s309 + $0x68] sm:$0xff]
        %v335 = vld [vmem:[%s309 + $0x70] sm:$0xff]
        %v336 = vld [vmem:[%s309 + $0x78] sm:$0xff]
        %v337 = vld [vmem:[%s309 + $0x80] sm:$0xff]
        %v338 = vld [vmem:[%s309 + $0x88] sm:$0xff]
        %v339 = vld [vmem:[%s309 + $0x90] sm:$0xff]
        %v340 = vld [vmem:[%s309 + $0x98] sm:$0xff]
        %v341 = vld [vmem:[%s309 + $0xa0] sm:$0xff]
        %v342 = vld [vmem:[%s309 + $0xa8] sm:$0xff]
        %v343 = vld [vmem:[%s309 + $0xb0] sm:$0xff]
        %v344 = vld [vmem:[%s309 + $0xb8] sm:$0xff]
        %v345 = vld [vmem:[%s309 + $0xc0] sm:$0xff]
        %v346 = vld [vmem:[%s309 + $0xc8] sm:$0xff]
        %v347 = vld [vmem:[%s309 + $0xd0] sm:$0xff]
        %v348 = vld [vmem:[%s309 + $0xd8] sm:$0xff]
        %v349 = vld [vmem:[%s309 + $0xe0] sm:$0xff]
        %v350 = vld [vmem:[%s309 + $0xe8] sm:$0xff]
        %v351 = vld [vmem:[%s309 + $0xf0] sm:$0xff]
        %v352 = vld [vmem:[%s309 + $0xf8] sm:$0xff]
        %v353 = vld [vmem:[%s309 + $0x100] sm:$0xff]
        %v354 = vld [vmem:[%s309 + $0x108] sm:$0xff]
        %v355 = vld [vmem:[%s309 + $0x110] sm:$0xff]
        %v356 = vld [vmem:[%s309 + $0x118] sm:$0xff]
        %v357 = vld [vmem:[%s309 + $0x120] sm:$0xff]
        %v358 = vld [vmem:[%s309 + $0x128] sm:$0xff]
        %v359 = vld [vmem:[%s309 + $0x130] sm:$0xff]
        %v360 = vld [vmem:[%s309 + $0x138] sm:$0xff]
        %v361 = vand.u32 2147483647, %v321
        %v362 = vand.u32 2147483647, %v322
        %v363 = vand.u32 2147483647, %v323
        %v364 = vand.u32 2147483647, %v324
        %v365 = vand.u32 2147483647, %v325
        %v366 = vand.u32 2147483647, %v326
        %v367 = vand.u32 2147483647, %v327
        %v368 = vand.u32 2147483647, %v328
        %v369 = vand.u32 2147483647, %v329
        %v370 = vand.u32 2147483647, %v330
        %v371 = vand.u32 2147483647, %v331
        %v372 = vand.u32 2147483647, %v332
        %v373 = vand.u32 2147483647, %v333
        %v374 = vand.u32 2147483647, %v334
        %v375 = vand.u32 2147483647, %v335
        %v376 = vand.u32 2147483647, %v336
        %v377 = vand.u32 2147483647, %v337
        %v378 = vand.u32 2147483647, %v338
        %v379 = vand.u32 2147483647, %v339
        %v380 = vand.u32 2147483647, %v340
        %v381 = vand.u32 2147483647, %v341
        %v382 = vand.u32 2147483647, %v342
        %v383 = vand.u32 2147483647, %v343
        %v384 = vand.u32 2147483647, %v344
        %v385 = vand.u32 2147483647, %v345
        %v386 = vand.u32 2147483647, %v346
        %v387 = vand.u32 2147483647, %v347
        %v388 = vand.u32 2147483647, %v348
        %v389 = vand.u32 2147483647, %v349
        %v390 = vand.u32 2147483647, %v350
        %v391 = vand.u32 2147483647, %v351
        %v392 = vand.u32 2147483647, %v352
        %v393 = vand.u32 2147483647, %v353
        %v394 = vand.u32 2147483647, %v354
        %v395 = vand.u32 2147483647, %v355
        %v396 = vand.u32 2147483647, %v356
        %v397 = vand.u32 2147483647, %v357
        %v398 = vand.u32 2147483647, %v358
        %v399 = vand.u32 2147483647, %v359
        %v400 = vand.u32 2147483647, %v360
        %v401 = vsub.f32 0.0, %v361
        %v402 = vsub.f32 0.0, %v362
        %v403 = vsub.f32 0.0, %v363
        %v404 = vsub.f32 0.0, %v364
        %v405 = vsub.f32 0.0, %v365
        %v406 = vsub.f32 0.0, %v366
        %v407 = vsub.f32 0.0, %v367
        %v408 = vsub.f32 0.0, %v368
        %v409 = vsub.f32 0.0, %v369
        %v410 = vsub.f32 0.0, %v370
        %v411 = vsub.f32 0.0, %v371
        %v412 = vsub.f32 0.0, %v372
        %v413 = vsub.f32 0.0, %v373
        %v414 = vsub.f32 0.0, %v374
        %v415 = vsub.f32 0.0, %v375
        %v416 = vsub.f32 0.0, %v376
        %v417 = vsub.f32 0.0, %v377
        %v418 = vsub.f32 0.0, %v378
        %v419 = vsub.f32 0.0, %v379
        %v420 = vsub.f32 0.0, %v380
        %v421 = vsub.f32 0.0, %v381
        %v422 = vsub.f32 0.0, %v382
        %v423 = vsub.f32 0.0, %v383
        %v424 = vsub.f32 0.0, %v384
        %v425 = vsub.f32 0.0, %v385
        %v426 = vsub.f32 0.0, %v386
        %v427 = vsub.f32 0.0, %v387
        %v428 = vsub.f32 0.0, %v388
        %v429 = vsub.f32 0.0, %v389
        %v430 = vsub.f32 0.0, %v390
        %v431 = vsub.f32 0.0, %v391
        %v432 = vsub.f32 0.0, %v392
        %v433 = vsub.f32 0.0, %v393
        %v434 = vsub.f32 0.0, %v394
        %v435 = vsub.f32 0.0, %v395
        %v436 = vsub.f32 0.0, %v396
        %v437 = vsub.f32 0.0, %v397
        %v438 = vsub.f32 0.0, %v398
        %v439 = vsub.f32 0.0, %v399
        %v440 = vsub.f32 0.0, %v400
        %v441 = vmul.f32 %v401, 1.442695
        %v442 = vpow.pop %v441
        %v443 = vmul.f32 %v402, 1.442695
        %v444 = vpow.pop %v443
        %v445 = vmul.f32 %v403, 1.442695
        %v446 = vpow.pop %v445
        %v447 = vmul.f32 %v404, 1.442695
        %v448 = vpow.pop %v447
        %v449 = vmul.f32 %v405, 1.442695
        %v450 = vpow.pop %v449
        %v451 = vmul.f32 %v406, 1.442695
        %v452 = vpow.pop %v451
        %v453 = vmul.f32 %v407, 1.442695
        %v454 = vpow.pop %v453
        %v455 = vmul.f32 %v408, 1.442695
        %v456 = vpow.pop %v455
        %v457 = vmul.f32 %v409, 1.442695
        %v458 = vpow.pop %v457
        %v459 = vmul.f32 %v410, 1.442695
        %v460 = vpow.pop %v459
        %v461 = vmul.f32 %v411, 1.442695
        %v462 = vpow.pop %v461
        %v463 = vmul.f32 %v412, 1.442695
        %v464 = vpow.pop %v463
        %v465 = vmul.f32 %v413, 1.442695
        %v466 = vpow.pop %v465
        %v467 = vmul.f32 %v414, 1.442695
        %v468 = vpow.pop %v467
        %v469 = vmul.f32 %v415, 1.442695
        %v470 = vpow.pop %v469
        %v471 = vmul.f32 %v416, 1.442695
        %v472 = vpow.pop %v471
        %v473 = vmul.f32 %v417, 1.442695
        %v474 = vpow.pop %v473
        %v475 = vmul.f32 %v418, 1.442695
        %v476 = vpow.pop %v475
        %v477 = vmul.f32 %v419, 1.442695
        %v478 = vpow.pop %v477
        %v479 = vmul.f32 %v420, 1.442695
        %v480 = vpow.pop %v479
        %v481 = vmul.f32 %v421, 1.442695
        %v482 = vpow.pop %v481
        %v483 = vmul.f32 %v422, 1.442695
        %v484 = vpow.pop %v483
        %v485 = vmul.f32 %v423, 1.442695
        %v486 = vpow.pop %v485
        %v487 = vmul.f32 %v424, 1.442695
        %v488 = vpow.pop %v487
        %v489 = vmul.f32 %v425, 1.442695
        %v490 = vpow.pop %v489
        %v491 = vmul.f32 %v426, 1.442695
        %v492 = vpow.pop %v491
        %v493 = vmul.f32 %v427, 1.442695
        %v494 = vpow.pop %v493
        %v495 = vmul.f32 %v428, 1.442695
        %v496 = vpow.pop %v495
        %v497 = vmul.f32 %v429, 1.442695
        %v498 = vpow.pop %v497
        %v499 = vmul.f32 %v430, 1.442695
        %v500 = vpow.pop %v499
        %v501 = vmul.f32 %v431, 1.442695
        %v502 = vpow.pop %v501
        %v503 = vmul.f32 %v432, 1.442695
        %v504 = vpow.pop %v503
        %v505 = vmul.f32 %v433, 1.442695
        %v506 = vpow.pop %v505
        %v507 = vmul.f32 %v434, 1.442695
        %v508 = vpow.pop %v507
        %v509 = vmul.f32 %v435, 1.442695
        %v510 = vpow.pop %v509
        %v511 = vmul.f32 %v436, 1.442695
        %v512 = vpow.pop %v511
        %v513 = vmul.f32 %v437, 1.442695
        %v514 = vpow.pop %v513
        %v515 = vmul.f32 %v438, 1.442695
        %v516 = vpow.pop %v515
        %v517 = vmul.f32 %v439, 1.442695
        %v518 = vpow.pop %v517
        %v519 = vmul.f32 %v440, 1.442695
        %v520 = vpow.pop %v519
        %v521 = vmax.f32 %v321, 0.0
        %v522 = vmax.f32 %v322, 0.0
        %v523 = vmax.f32 %v323, 0.0
        %v524 = vmax.f32 %v324, 0.0
        %v525 = vmax.f32 %v325, 0.0
        %v526 = vmax.f32 %v326, 0.0
        %v527 = vmax.f32 %v327, 0.0
        %v528 = vmax.f32 %v328, 0.0
        %v529 = vmax.f32 %v329, 0.0
        %v530 = vmax.f32 %v330, 0.0
        %v531 = vmax.f32 %v331, 0.0
        %v532 = vmax.f32 %v332, 0.0
        %v533 = vmax.f32 %v333, 0.0
        %v534 = vmax.f32 %v334, 0.0
        %v535 = vmax.f32 %v335, 0.0
        %v536 = vmax.f32 %v336, 0.0
        %v537 = vmax.f32 %v337, 0.0
        %v538 = vmax.f32 %v338, 0.0
        %v539 = vmax.f32 %v339, 0.0
        %v540 = vmax.f32 %v340, 0.0
        %v541 = vmax.f32 %v341, 0.0
        %v542 = vmax.f32 %v342, 0.0
        %v543 = vmax.f32 %v343, 0.0
        %v544 = vmax.f32 %v344, 0.0
        %v545 = vmax.f32 %v345, 0.0
        %v546 = vmax.f32 %v346, 0.0
        %v547 = vmax.f32 %v347, 0.0
        %v548 = vmax.f32 %v348, 0.0
        %v549 = vmax.f32 %v349, 0.0
        %v550 = vmax.f32 %v350, 0.0
        %v551 = vmax.f32 %v351, 0.0
        %v552 = vmax.f32 %v352, 0.0
        %v553 = vmax.f32 %v353, 0.0
        %v554 = vmax.f32 %v354, 0.0
        %v555 = vmax.f32 %v355, 0.0
        %v556 = vmax.f32 %v356, 0.0
        %v557 = vmax.f32 %v357, 0.0
        %v558 = vmax.f32 %v358, 0.0
        %v559 = vmax.f32 %v359, 0.0
        %v560 = vmax.f32 %v360, 0.0
        %v561 = vadd.f32 %v442, 1.0
        %v562 = vlog2.pop %v561
        %v563 = vmul.f32 %v562, 0.6931472
        %v564 = vmul.f32 -0.5, %v442
        %v565 = vadd.f32 %v564, 1.0
        %v566 = vmul.f32 %v565, %v442
        %v567 = vand.u32 2147483647, %v442
        %vm568 = vcmp.lt.f32.partialorder %v567, 0.0004427343
        %v569 = vsel %vm568, %v566, %v563
        %v570 = vadd.f32 %v444, 1.0
        %v571 = vlog2.pop %v570
        %v572 = vmul.f32 %v571, 0.6931472
        %v573 = vmul.f32 -0.5, %v444
        %v574 = vadd.f32 %v573, 1.0
        %v575 = vmul.f32 %v574, %v444
        %v576 = vand.u32 2147483647, %v444
        %vm577 = vcmp.lt.f32.partialorder %v576, 0.0004427343
        %v578 = vsel %vm577, %v575, %v572
        %v579 = vadd.f32 %v446, 1.0
        %v580 = vlog2.pop %v579
        %v581 = vmul.f32 %v580, 0.6931472
        %v582 = vmul.f32 -0.5, %v446
        %v583 = vadd.f32 %v582, 1.0
        %v584 = vmul.f32 %v583, %v446
        %v585 = vand.u32 2147483647, %v446
        %vm586 = vcmp.lt.f32.partialorder %v585, 0.0004427343
        %v587 = vsel %vm586, %v584, %v581
        %v588 = vadd.f32 %v448, 1.0
        %v589 = vlog2.pop %v588
        %v590 = vmul.f32 %v589, 0.6931472
        %v591 = vmul.f32 -0.5, %v448
        %v592 = vadd.f32 %v591, 1.0
        %v593 = vmul.f32 %v592, %v448
        %v594 = vand.u32 2147483647, %v448
        %vm595 = vcmp.lt.f32.partialorder %v594, 0.0004427343
        %v596 = vsel %vm595, %v593, %v590
        %v597 = vadd.f32 %v450, 1.0
        %v598 = vlog2.pop %v597
        %v599 = vmul.f32 %v598, 0.6931472
        %v600 = vmul.f32 -0.5, %v450
        %v601 = vadd.f32 %v600, 1.0
        %v602 = vmul.f32 %v601, %v450
        %v603 = vand.u32 2147483647, %v450
        %vm604 = vcmp.lt.f32.partialorder %v603, 0.0004427343
        %v605 = vsel %vm604, %v602, %v599
        %v606 = vadd.f32 %v452, 1.0
        %v607 = vlog2.pop %v606
        %v608 = vmul.f32 %v607, 0.6931472
        %v609 = vmul.f32 -0.5, %v452
        %v610 = vadd.f32 %v609, 1.0
        %v611 = vmul.f32 %v610, %v452
        %v612 = vand.u32 2147483647, %v452
        %vm613 = vcmp.lt.f32.partialorder %v612, 0.0004427343
        %v614 = vsel %vm613, %v611, %v608
        %v615 = vadd.f32 %v454, 1.0
        %v616 = vlog2.pop %v615
        %v617 = vmul.f32 %v616, 0.6931472
        %v618 = vmul.f32 -0.5, %v454
        %v619 = vadd.f32 %v618, 1.0
        %v620 = vmul.f32 %v619, %v454
        %v621 = vand.u32 2147483647, %v454
        %vm622 = vcmp.lt.f32.partialorder %v621, 0.0004427343
        %v623 = vsel %vm622, %v620, %v617
        %v624 = vadd.f32 %v456, 1.0
        %v625 = vlog2.pop %v624
        %v626 = vmul.f32 %v625, 0.6931472
        %v627 = vmul.f32 -0.5, %v456
        %v628 = vadd.f32 %v627, 1.0
        %v629 = vmul.f32 %v628, %v456
        %v630 = vand.u32 2147483647, %v456
        %vm631 = vcmp.lt.f32.partialorder %v630, 0.0004427343
        %v632 = vsel %vm631, %v629, %v626
        %v633 = vadd.f32 %v458, 1.0
        %v634 = vlog2.pop %v633
        %v635 = vmul.f32 %v634, 0.6931472
        %v636 = vmul.f32 -0.5, %v458
        %v637 = vadd.f32 %v636, 1.0
        %v638 = vmul.f32 %v637, %v458
        %v639 = vand.u32 2147483647, %v458
        %vm640 = vcmp.lt.f32.partialorder %v639, 0.0004427343
        %v641 = vsel %vm640, %v638, %v635
        %v642 = vadd.f32 %v460, 1.0
        %v643 = vlog2.pop %v642
        %v644 = vmul.f32 %v643, 0.6931472
        %v645 = vmul.f32 -0.5, %v460
        %v646 = vadd.f32 %v645, 1.0
        %v647 = vmul.f32 %v646, %v460
        %v648 = vand.u32 2147483647, %v460
        %vm649 = vcmp.lt.f32.partialorder %v648, 0.0004427343
        %v650 = vsel %vm649, %v647, %v644
        %v651 = vadd.f32 %v462, 1.0
        %v652 = vlog2.pop %v651
        %v653 = vmul.f32 %v652, 0.6931472
        %v654 = vmul.f32 -0.5, %v462
        %v655 = vadd.f32 %v654, 1.0
        %v656 = vmul.f32 %v655, %v462
        %v657 = vand.u32 2147483647, %v462
        %vm658 = vcmp.lt.f32.partialorder %v657, 0.0004427343
        %v659 = vsel %vm658, %v656, %v653
        %v660 = vadd.f32 %v464, 1.0
        %v661 = vlog2.pop %v660
        %v662 = vmul.f32 %v661, 0.6931472
        %v663 = vmul.f32 -0.5, %v464
        %v664 = vadd.f32 %v663, 1.0
        %v665 = vmul.f32 %v664, %v464
        %v666 = vand.u32 2147483647, %v464
        %vm667 = vcmp.lt.f32.partialorder %v666, 0.0004427343
        %v668 = vsel %vm667, %v665, %v662
        %v669 = vadd.f32 %v466, 1.0
        %v670 = vlog2.pop %v669
        %v671 = vmul.f32 %v670, 0.6931472
        %v672 = vmul.f32 -0.5, %v466
        %v673 = vadd.f32 %v672, 1.0
        %v674 = vmul.f32 %v673, %v466
        %v675 = vand.u32 2147483647, %v466
        %vm676 = vcmp.lt.f32.partialorder %v675, 0.0004427343
        %v677 = vsel %vm676, %v674, %v671
        %v678 = vadd.f32 %v468, 1.0
        %v679 = vlog2.pop %v678
        %v680 = vmul.f32 %v679, 0.6931472
        %v681 = vmul.f32 -0.5, %v468
        %v682 = vadd.f32 %v681, 1.0
        %v683 = vmul.f32 %v682, %v468
        %v684 = vand.u32 2147483647, %v468
        %vm685 = vcmp.lt.f32.partialorder %v684, 0.0004427343
        %v686 = vsel %vm685, %v683, %v680
        %v687 = vadd.f32 %v470, 1.0
        %v688 = vlog2.pop %v687
        %v689 = vmul.f32 %v688, 0.6931472
        %v690 = vmul.f32 -0.5, %v470
        %v691 = vadd.f32 %v690, 1.0
        %v692 = vmul.f32 %v691, %v470
        %v693 = vand.u32 2147483647, %v470
        %vm694 = vcmp.lt.f32.partialorder %v693, 0.0004427343
        %v695 = vsel %vm694, %v692, %v689
        %v696 = vadd.f32 %v472, 1.0
        %v697 = vlog2.pop %v696
        %v698 = vmul.f32 %v697, 0.6931472
        %v699 = vmul.f32 -0.5, %v472
        %v700 = vadd.f32 %v699, 1.0
        %v701 = vmul.f32 %v700, %v472
        %v702 = vand.u32 2147483647, %v472
        %vm703 = vcmp.lt.f32.partialorder %v702, 0.0004427343
        %v704 = vsel %vm703, %v701, %v698
        %v705 = vadd.f32 %v474, 1.0
        %v706 = vlog2.pop %v705
        %v707 = vmul.f32 %v706, 0.6931472
        %v708 = vmul.f32 -0.5, %v474
        %v709 = vadd.f32 %v708, 1.0
        %v710 = vmul.f32 %v709, %v474
        %v711 = vand.u32 2147483647, %v474
        %vm712 = vcmp.lt.f32.partialorder %v711, 0.0004427343
        %v713 = vsel %vm712, %v710, %v707
        %v714 = vadd.f32 %v476, 1.0
        %v715 = vlog2.pop %v714
        %v716 = vmul.f32 %v715, 0.6931472
        %v717 = vmul.f32 -0.5, %v476
        %v718 = vadd.f32 %v717, 1.0
        %v719 = vmul.f32 %v718, %v476
        %v720 = vand.u32 2147483647, %v476
        %vm721 = vcmp.lt.f32.partialorder %v720, 0.0004427343
        %v722 = vsel %vm721, %v719, %v716
        %v723 = vadd.f32 %v478, 1.0
        %v724 = vlog2.pop %v723
        %v725 = vmul.f32 %v724, 0.6931472
        %v726 = vmul.f32 -0.5, %v478
        %v727 = vadd.f32 %v726, 1.0
        %v728 = vmul.f32 %v727, %v478
        %v729 = vand.u32 2147483647, %v478
        %vm730 = vcmp.lt.f32.partialorder %v729, 0.0004427343
        %v731 = vsel %vm730, %v728, %v725
        %v732 = vadd.f32 %v480, 1.0
        %v733 = vlog2.pop %v732
        %v734 = vmul.f32 %v733, 0.6931472
        %v735 = vmul.f32 -0.5, %v480
        %v736 = vadd.f32 %v735, 1.0
        %v737 = vmul.f32 %v736, %v480
        %v738 = vand.u32 2147483647, %v480
        %vm739 = vcmp.lt.f32.partialorder %v738, 0.0004427343
        %v740 = vsel %vm739, %v737, %v734
        %v741 = vadd.f32 %v482, 1.0
        %v742 = vlog2.pop %v741
        %v743 = vmul.f32 %v742, 0.6931472
        %v744 = vmul.f32 -0.5, %v482
        %v745 = vadd.f32 %v744, 1.0
        %v746 = vmul.f32 %v745, %v482
        %v747 = vand.u32 2147483647, %v482
        %vm748 = vcmp.lt.f32.partialorder %v747, 0.0004427343
        %v749 = vsel %vm748, %v746, %v743
        %v750 = vadd.f32 %v484, 1.0
        %v751 = vlog2.pop %v750
        %v752 = vmul.f32 %v751, 0.6931472
        %v753 = vmul.f32 -0.5, %v484
        %v754 = vadd.f32 %v753, 1.0
        %v755 = vmul.f32 %v754, %v484
        %v756 = vand.u32 2147483647, %v484
        %vm757 = vcmp.lt.f32.partialorder %v756, 0.0004427343
        %v758 = vsel %vm757, %v755, %v752
        %v759 = vadd.f32 %v486, 1.0
        %v760 = vlog2.pop %v759
        %v761 = vmul.f32 %v760, 0.6931472
        %v762 = vmul.f32 -0.5, %v486
        %v763 = vadd.f32 %v762, 1.0
        %v764 = vmul.f32 %v763, %v486
        %v765 = vand.u32 2147483647, %v486
        %vm766 = vcmp.lt.f32.partialorder %v765, 0.0004427343
        %v767 = vsel %vm766, %v764, %v761
        %v768 = vadd.f32 %v488, 1.0
        %v769 = vlog2.pop %v768
        %v770 = vmul.f32 %v769, 0.6931472
        %v771 = vmul.f32 -0.5, %v488
        %v772 = vadd.f32 %v771, 1.0
        %v773 = vmul.f32 %v772, %v488
        %v774 = vand.u32 2147483647, %v488
        %vm775 = vcmp.lt.f32.partialorder %v774, 0.0004427343
        %v776 = vsel %vm775, %v773, %v770
        %v777 = vadd.f32 %v490, 1.0
        %v778 = vlog2.pop %v777
        %v779 = vmul.f32 %v778, 0.6931472
        %v780 = vmul.f32 -0.5, %v490
        %v781 = vadd.f32 %v780, 1.0
        %v782 = vmul.f32 %v781, %v490
        %v783 = vand.u32 2147483647, %v490
        %vm784 = vcmp.lt.f32.partialorder %v783, 0.0004427343
        %v785 = vsel %vm784, %v782, %v779
        %v786 = vadd.f32 %v492, 1.0
        %v787 = vlog2.pop %v786
        %v788 = vmul.f32 %v787, 0.6931472
        %v789 = vmul.f32 -0.5, %v492
        %v790 = vadd.f32 %v789, 1.0
        %v791 = vmul.f32 %v790, %v492
        %v792 = vand.u32 2147483647, %v492
        %vm793 = vcmp.lt.f32.partialorder %v792, 0.0004427343
        %v794 = vsel %vm793, %v791, %v788
        %v795 = vadd.f32 %v494, 1.0
        %v796 = vlog2.pop %v795
        %v797 = vmul.f32 %v796, 0.6931472
        %v798 = vmul.f32 -0.5, %v494
        %v799 = vadd.f32 %v798, 1.0
        %v800 = vmul.f32 %v799, %v494
        %v801 = vand.u32 2147483647, %v494
        %vm802 = vcmp.lt.f32.partialorder %v801, 0.0004427343
        %v803 = vsel %vm802, %v800, %v797
        %v804 = vadd.f32 %v496, 1.0
        %v805 = vlog2.pop %v804
        %v806 = vmul.f32 %v805, 0.6931472
        %v807 = vmul.f32 -0.5, %v496
        %v808 = vadd.f32 %v807, 1.0
        %v809 = vmul.f32 %v808, %v496
        %v810 = vand.u32 2147483647, %v496
        %vm811 = vcmp.lt.f32.partialorder %v810, 0.0004427343
        %v812 = vsel %vm811, %v809, %v806
        %v813 = vadd.f32 %v498, 1.0
        %v814 = vlog2.pop %v813
        %v815 = vmul.f32 %v814, 0.6931472
        %v816 = vmul.f32 -0.5, %v498
        %v817 = vadd.f32 %v816, 1.0
        %v818 = vmul.f32 %v817, %v498
        %v819 = vand.u32 2147483647, %v498
        %vm820 = vcmp.lt.f32.partialorder %v819, 0.0004427343
        %v821 = vsel %vm820, %v818, %v815
        %v822 = vadd.f32 %v500, 1.0
        %v823 = vlog2.pop %v822
        %v824 = vmul.f32 %v823, 0.6931472
        %v825 = vmul.f32 -0.5, %v500
        %v826 = vadd.f32 %v825, 1.0
        %v827 = vmul.f32 %v826, %v500
        %v828 = vand.u32 2147483647, %v500
        %vm829 = vcmp.lt.f32.partialorder %v828, 0.0004427343
        %v830 = vsel %vm829, %v827, %v824
        %v831 = vadd.f32 %v502, 1.0
        %v832 = vlog2.pop %v831
        %v833 = vmul.f32 %v832, 0.6931472
        %v834 = vmul.f32 -0.5, %v502
        %v835 = vadd.f32 %v834, 1.0
        %v836 = vmul.f32 %v835, %v502
        %v837 = vand.u32 2147483647, %v502
        %vm838 = vcmp.lt.f32.partialorder %v837, 0.0004427343
        %v839 = vsel %vm838, %v836, %v833
        %v840 = vadd.f32 %v504, 1.0
        %v841 = vlog2.pop %v840
        %v842 = vmul.f32 %v841, 0.6931472
        %v843 = vmul.f32 -0.5, %v504
        %v844 = vadd.f32 %v843, 1.0
        %v845 = vmul.f32 %v844, %v504
        %v846 = vand.u32 2147483647, %v504
        %vm847 = vcmp.lt.f32.partialorder %v846, 0.0004427343
        %v848 = vsel %vm847, %v845, %v842
        %v849 = vadd.f32 %v506, 1.0
        %v850 = vlog2.pop %v849
        %v851 = vmul.f32 %v850, 0.6931472
        %v852 = vmul.f32 -0.5, %v506
        %v853 = vadd.f32 %v852, 1.0
        %v854 = vmul.f32 %v853, %v506
        %v855 = vand.u32 2147483647, %v506
        %vm856 = vcmp.lt.f32.partialorder %v855, 0.0004427343
        %v857 = vsel %vm856, %v854, %v851
        %v858 = vadd.f32 %v508, 1.0
        %v859 = vlog2.pop %v858
        %v860 = vmul.f32 %v859, 0.6931472
        %v861 = vmul.f32 -0.5, %v508
        %v862 = vadd.f32 %v861, 1.0
        %v863 = vmul.f32 %v862, %v508
        %v864 = vand.u32 2147483647, %v508
        %vm865 = vcmp.lt.f32.partialorder %v864, 0.0004427343
        %v866 = vsel %vm865, %v863, %v860
        %v867 = vadd.f32 %v510, 1.0
        %v868 = vlog2.pop %v867
        %v869 = vmul.f32 %v868, 0.6931472
        %v870 = vmul.f32 -0.5, %v510
        %v871 = vadd.f32 %v870, 1.0
        %v872 = vmul.f32 %v871, %v510
        %v873 = vand.u32 2147483647, %v510
        %vm874 = vcmp.lt.f32.partialorder %v873, 0.0004427343
        %v875 = vsel %vm874, %v872, %v869
        %v876 = vadd.f32 %v512, 1.0
        %v877 = vlog2.pop %v876
        %v878 = vmul.f32 %v877, 0.6931472
        %v879 = vmul.f32 -0.5, %v512
        %v880 = vadd.f32 %v879, 1.0
        %v881 = vmul.f32 %v880, %v512
        %v882 = vand.u32 2147483647, %v512
        %vm883 = vcmp.lt.f32.partialorder %v882, 0.0004427343
        %v884 = vsel %vm883, %v881, %v878
        %v885 = vadd.f32 %v514, 1.0
        %v886 = vlog2.pop %v885
        %v887 = vmul.f32 %v886, 0.6931472
        %v888 = vmul.f32 -0.5, %v514
        %v889 = vadd.f32 %v888, 1.0
        %v890 = vmul.f32 %v889, %v514
        %v891 = vand.u32 2147483647, %v514
        %vm892 = vcmp.lt.f32.partialorder %v891, 0.0004427343
        %v893 = vsel %vm892, %v890, %v887
        %v894 = vadd.f32 %v516, 1.0
        %v895 = vlog2.pop %v894
        %v896 = vmul.f32 %v895, 0.6931472
        %v897 = vmul.f32 -0.5, %v516
        %v898 = vadd.f32 %v897, 1.0
        %v899 = vmul.f32 %v898, %v516
        %v900 = vand.u32 2147483647, %v516
        %vm901 = vcmp.lt.f32.partialorder %v900, 0.0004427343
        %v902 = vsel %vm901, %v899, %v896
        %v903 = vadd.f32 %v518, 1.0
        %v904 = vlog2.pop %v903
        %v905 = vmul.f32 %v904, 0.6931472
        %v906 = vmul.f32 -0.5, %v518
        %v907 = vadd.f32 %v906, 1.0
        %v908 = vmul.f32 %v907, %v518
        %v909 = vand.u32 2147483647, %v518
        %vm910 = vcmp.lt.f32.partialorder %v909, 0.0004427343
        %v911 = vsel %vm910, %v908, %v905
        %v912 = vadd.f32 %v520, 1.0
        %v913 = vlog2.pop %v912
        %v914 = vmul.f32 %v913, 0.6931472
        %v915 = vmul.f32 -0.5, %v520
        %v916 = vadd.f32 %v915, 1.0
        %v917 = vmul.f32 %v916, %v520
        %v918 = vand.u32 2147483647, %v520
        %vm919 = vcmp.lt.f32.partialorder %v918, 0.0004427343
        %v920 = vsel %vm919, %v917, %v914
        %v921 = vadd.f32 %v521, %v569
        %v922 = vadd.f32 %v522, %v578
        %v923 = vadd.f32 %v523, %v587
        %v924 = vadd.f32 %v524, %v596
        %v925 = vadd.f32 %v525, %v605
        %v926 = vadd.f32 %v526, %v614
        %v927 = vadd.f32 %v527, %v623
        %v928 = vadd.f32 %v528, %v632
        %v929 = vadd.f32 %v529, %v641
        %v930 = vadd.f32 %v530, %v650
        %v931 = vadd.f32 %v531, %v659
        %v932 = vadd.f32 %v532, %v668
        %v933 = vadd.f32 %v533, %v677
        %v934 = vadd.f32 %v534, %v686
        %v935 = vadd.f32 %v535, %v695
        %v936 = vadd.f32 %v536, %v704
        %v937 = vadd.f32 %v537, %v713
        %v938 = vadd.f32 %v538, %v722
        %v939 = vadd.f32 %v539, %v731
        %v940 = vadd.f32 %v540, %v740
        %v941 = vadd.f32 %v541, %v749
        %v942 = vadd.f32 %v542, %v758
        %v943 = vadd.f32 %v543, %v767
        %v944 = vadd.f32 %v544, %v776
        %v945 = vadd.f32 %v545, %v785
        %v946 = vadd.f32 %v546, %v794
        %v947 = vadd.f32 %v547, %v803
        %v948 = vadd.f32 %v548, %v812
        %v949 = vadd.f32 %v549, %v821
        %v950 = vadd.f32 %v550, %v830
        %v951 = vadd.f32 %v551, %v839
        %v952 = vadd.f32 %v552, %v848
        %v953 = vadd.f32 %v553, %v857
        %v954 = vadd.f32 %v554, %v866
        %v955 = vadd.f32 %v555, %v875
        %v956 = vadd.f32 %v556, %v884
        %v957 = vadd.f32 %v557, %v893
        %v958 = vadd.f32 %v558, %v902
        %v959 = vadd.f32 %v559, %v911
        %v960 = vadd.f32 %v560, %v920
        %v961 = vadd.f32 %v442, 1.0
        %v962 = vadd.f32 %v444, 1.0
        %v963 = vadd.f32 %v446, 1.0
        %v964 = vadd.f32 %v448, 1.0
        %v965 = vadd.f32 %v450, 1.0
        %v966 = vadd.f32 %v452, 1.0
        %v967 = vadd.f32 %v454, 1.0
        %v968 = vadd.f32 %v456, 1.0
        %v969 = vadd.f32 %v458, 1.0
        %v970 = vadd.f32 %v460, 1.0
        %v971 = vadd.f32 %v462, 1.0
        %v972 = vadd.f32 %v464, 1.0
        %v973 = vadd.f32 %v466, 1.0
        %v974 = vadd.f32 %v468, 1.0
        %v975 = vadd.f32 %v470, 1.0
        %v976 = vadd.f32 %v472, 1.0
        %v977 = vadd.f32 %v474, 1.0
        %v978 = vadd.f32 %v476, 1.0
        %v979 = vadd.f32 %v478, 1.0
        %v980 = vadd.f32 %v480, 1.0
        %v981 = vadd.f32 %v482, 1.0
        %v982 = vadd.f32 %v484, 1.0
        %v983 = vadd.f32 %v486, 1.0
        %v984 = vadd.f32 %v488, 1.0
        %v985 = vadd.f32 %v490, 1.0
        %v986 = vadd.f32 %v492, 1.0
        %v987 = vadd.f32 %v494, 1.0
        %v988 = vadd.f32 %v496, 1.0
        %v989 = vadd.f32 %v498, 1.0
        %v990 = vadd.f32 %v500, 1.0
        %v991 = vadd.f32 %v502, 1.0
        %v992 = vadd.f32 %v504, 1.0
        %v993 = vadd.f32 %v506, 1.0
        %v994 = vadd.f32 %v508, 1.0
        %v995 = vadd.f32 %v510, 1.0
        %v996 = vadd.f32 %v512, 1.0
        %v997 = vadd.f32 %v514, 1.0
        %v998 = vadd.f32 %v516, 1.0
        %v999 = vadd.f32 %v518, 1.0
        %v1000 = vadd.f32 %v520, 1.0
        %v1001 = vrcp.pop %v961
        %v1002 = vrcp.pop %v962
        %v1003 = vrcp.pop %v963
        %v1004 = vrcp.pop %v964
        %v1005 = vrcp.pop %v965
        %v1006 = vrcp.pop %v966
        %v1007 = vrcp.pop %v967
        %v1008 = vrcp.pop %v968
        %v1009 = vrcp.pop %v969
        %v1010 = vrcp.pop %v970
        %v1011 = vrcp.pop %v971
        %v1012 = vrcp.pop %v972
        %v1013 = vrcp.pop %v973
        %v1014 = vrcp.pop %v974
        %v1015 = vrcp.pop %v975
        %v1016 = vrcp.pop %v976
        %v1017 = vrcp.pop %v977
        %v1018 = vrcp.pop %v978
        %v1019 = vrcp.pop %v979
        %v1020 = vrcp.pop %v980
        %v1021 = vrcp.pop %v981
        %v1022 = vrcp.pop %v982
        %v1023 = vrcp.pop %v983
        %v1024 = vrcp.pop %v984
        %v1025 = vrcp.pop %v985
        %v1026 = vrcp.pop %v986
        %v1027 = vrcp.pop %v987
        %v1028 = vrcp.pop %v988
        %v1029 = vrcp.pop %v989
        %v1030 = vrcp.pop %v990
        %v1031 = vrcp.pop %v991
        %v1032 = vrcp.pop %v992
        %v1033 = vrcp.pop %v993
        %v1034 = vrcp.pop %v994
        %v1035 = vrcp.pop %v995
        %v1036 = vrcp.pop %v996
        %v1037 = vrcp.pop %v997
        %v1038 = vrcp.pop %v998
        %v1039 = vrcp.pop %v999
        %v1040 = vrcp.pop %v1000
        %v1041 = vmul.f32 %v961, %v1001
        %v1042 = vmul.f32 %v962, %v1002
        %v1043 = vmul.f32 %v963, %v1003
        %v1044 = vmul.f32 %v964, %v1004
        %v1045 = vmul.f32 %v965, %v1005
        %v1046 = vmul.f32 %v966, %v1006
        %v1047 = vmul.f32 %v967, %v1007
        %v1048 = vmul.f32 %v968, %v1008
        %v1049 = vmul.f32 %v969, %v1009
        %v1050 = vmul.f32 %v970, %v1010
        %v1051 = vmul.f32 %v971, %v1011
        %v1052 = vmul.f32 %v972, %v1012
        %v1053 = vmul.f32 %v973, %v1013
        %v1054 = vmul.f32 %v974, %v1014
        %v1055 = vmul.f32 %v975, %v1015
        %v1056 = vmul.f32 %v976, %v1016
        %v1057 = vmul.f32 %v977, %v1017
        %v1058 = vmul.f32 %v978, %v1018
        %v1059 = vmul.f32 %v979, %v1019
        %v1060 = vmul.f32 %v980, %v1020
        %v1061 = vmul.f32 %v981, %v1021
        %v1062 = vmul.f32 %v982, %v1022
        %v1063 = vmul.f32 %v983, %v1023
        %v1064 = vmul.f32 %v984, %v1024
        %v1065 = vmul.f32 %v985, %v1025
        %v1066 = vmul.f32 %v986, %v1026
        %v1067 = vmul.f32 %v987, %v1027
        %v1068 = vmul.f32 %v988, %v1028
        %v1069 = vmul.f32 %v989, %v1029
        %v1070 = vmul.f32 %v990, %v1030
        %v1071 = vmul.f32 %v991, %v1031
        %v1072 = vmul.f32 %v992, %v1032
        %v1073 = vmul.f32 %v993, %v1033
        %v1074 = vmul.f32 %v994, %v1034
        %v1075 = vmul.f32 %v995, %v1035
        %v1076 = vmul.f32 %v996, %v1036
        %v1077 = vmul.f32 %v997, %v1037
        %v1078 = vmul.f32 %v998, %v1038
        %v1079 = vmul.f32 %v999, %v1039
        %v1080 = vmul.f32 %v1000, %v1040
        %v1081 = vsub.f32 2.0, %v1041
        %v1082 = vsub.f32 2.0, %v1042
        %v1083 = vsub.f32 2.0, %v1043
        %v1084 = vsub.f32 2.0, %v1044
        %v1085 = vsub.f32 2.0, %v1045
        %v1086 = vsub.f32 2.0, %v1046
        %v1087 = vsub.f32 2.0, %v1047
        %v1088 = vsub.f32 2.0, %v1048
        %v1089 = vsub.f32 2.0, %v1049
        %v1090 = vsub.f32 2.0, %v1050
        %v1091 = vsub.f32 2.0, %v1051
        %v1092 = vsub.f32 2.0, %v1052
        %v1093 = vsub.f32 2.0, %v1053
        %v1094 = vsub.f32 2.0, %v1054
        %v1095 = vsub.f32 2.0, %v1055
        %v1096 = vsub.f32 2.0, %v1056
        %v1097 = vsub.f32 2.0, %v1057
        %v1098 = vsub.f32 2.0, %v1058
        %v1099 = vsub.f32 2.0, %v1059
        %v1100 = vsub.f32 2.0, %v1060
        %v1101 = vsub.f32 2.0, %v1061
        %v1102 = vsub.f32 2.0, %v1062
        %v1103 = vsub.f32 2.0, %v1063
        %v1104 = vsub.f32 2.0, %v1064
        %v1105 = vsub.f32 2.0, %v1065
        %v1106 = vsub.f32 2.0, %v1066
        %v1107 = vsub.f32 2.0, %v1067
        %v1108 = vsub.f32 2.0, %v1068
        %v1109 = vsub.f32 2.0, %v1069
        %v1110 = vsub.f32 2.0, %v1070
        %v1111 = vsub.f32 2.0, %v1071
        %v1112 = vsub.f32 2.0, %v1072
        %v1113 = vsub.f32 2.0, %v1073
        %v1114 = vsub.f32 2.0, %v1074
        %v1115 = vsub.f32 2.0, %v1075
        %v1116 = vsub.f32 2.0, %v1076
        %v1117 = vsub.f32 2.0, %v1077
        %v1118 = vsub.f32 2.0, %v1078
        %v1119 = vsub.f32 2.0, %v1079
        %v1120 = vsub.f32 2.0, %v1080
        %v1121 = vmul.f32 %v1001, %v1081
        %v1122 = vmul.f32 %v1002, %v1082
        %v1123 = vmul.f32 %v1003, %v1083
        %v1124 = vmul.f32 %v1004, %v1084
        %v1125 = vmul.f32 %v1005, %v1085
        %v1126 = vmul.f32 %v1006, %v1086
        %v1127 = vmul.f32 %v1007, %v1087
        %v1128 = vmul.f32 %v1008, %v1088
        %v1129 = vmul.f32 %v1009, %v1089
        %v1130 = vmul.f32 %v1010, %v1090
        %v1131 = vmul.f32 %v1011, %v1091
        %v1132 = vmul.f32 %v1012, %v1092
        %v1133 = vmul.f32 %v1013, %v1093
        %v1134 = vmul.f32 %v1014, %v1094
        %v1135 = vmul.f32 %v1015, %v1095
        %v1136 = vmul.f32 %v1016, %v1096
        %v1137 = vmul.f32 %v1017, %v1097
        %v1138 = vmul.f32 %v1018, %v1098
        %v1139 = vmul.f32 %v1019, %v1099
        %v1140 = vmul.f32 %v1020, %v1100
        %v1141 = vmul.f32 %v1021, %v1101
        %v1142 = vmul.f32 %v1022, %v1102
        %v1143 = vmul.f32 %v1023, %v1103
        %v1144 = vmul.f32 %v1024, %v1104
        %v1145 = vmul.f32 %v1025, %v1105
        %v1146 = vmul.f32 %v1026, %v1106
        %v1147 = vmul.f32 %v1027, %v1107
        %v1148 = vmul.f32 %v1028, %v1108
        %v1149 = vmul.f32 %v1029, %v1109
        %v1150 = vmul.f32 %v1030, %v1110
        %v1151 = vmul.f32 %v1031, %v1111
        %v1152 = vmul.f32 %v1032, %v1112
        %v1153 = vmul.f32 %v1033, %v1113
        %v1154 = vmul.f32 %v1034, %v1114
        %v1155 = vmul.f32 %v1035, %v1115
        %v1156 = vmul.f32 %v1036, %v1116
        %v1157 = vmul.f32 %v1037, %v1117
        %v1158 = vmul.f32 %v1038, %v1118
        %v1159 = vmul.f32 %v1039, %v1119
        %v1160 = vmul.f32 %v1040, %v1120
        %vm1161 = vcmp.ge.f32.partialorder %v321, 0.0
        %vm1162 = vcmp.ge.f32.partialorder %v322, 0.0
        %vm1163 = vcmp.ge.f32.partialorder %v323, 0.0
        %vm1164 = vcmp.ge.f32.partialorder %v324, 0.0
        %vm1165 = vcmp.ge.f32.partialorder %v325, 0.0
        %vm1166 = vcmp.ge.f32.partialorder %v326, 0.0
        %vm1167 = vcmp.ge.f32.partialorder %v327, 0.0
        %vm1168 = vcmp.ge.f32.partialorder %v328, 0.0
        %vm1169 = vcmp.ge.f32.partialorder %v329, 0.0
        %vm1170 = vcmp.ge.f32.partialorder %v330, 0.0
        %vm1171 = vcmp.ge.f32.partialorder %v331, 0.0
        %vm1172 = vcmp.ge.f32.partialorder %v332, 0.0
        %vm1173 = vcmp.ge.f32.partialorder %v333, 0.0
        %vm1174 = vcmp.ge.f32.partialorder %v334, 0.0
        %vm1175 = vcmp.ge.f32.partialorder %v335, 0.0
        %vm1176 = vcmp.ge.f32.partialorder %v336, 0.0
        %vm1177 = vcmp.ge.f32.partialorder %v337, 0.0
        %vm1178 = vcmp.ge.f32.partialorder %v338, 0.0
        %vm1179 = vcmp.ge.f32.partialorder %v339, 0.0
        %vm1180 = vcmp.ge.f32.partialorder %v340, 0.0
        %vm1181 = vcmp.ge.f32.partialorder %v341, 0.0
        %vm1182 = vcmp.ge.f32.partialorder %v342, 0.0
        %vm1183 = vcmp.ge.f32.partialorder %v343, 0.0
        %vm1184 = vcmp.ge.f32.partialorder %v344, 0.0
        %vm1185 = vcmp.ge.f32.partialorder %v345, 0.0
        %vm1186 = vcmp.ge.f32.partialorder %v346, 0.0
        %vm1187 = vcmp.ge.f32.partialorder %v347, 0.0
        %vm1188 = vcmp.ge.f32.partialorder %v348, 0.0
        %vm1189 = vcmp.ge.f32.partialorder %v349, 0.0
        %vm1190 = vcmp.ge.f32.partialorder %v350, 0.0
        %vm1191 = vcmp.ge.f32.partialorder %v351, 0.0
        %vm1192 = vcmp.ge.f32.partialorder %v352, 0.0
        %vm1193 = vcmp.ge.f32.partialorder %v353, 0.0
        %vm1194 = vcmp.ge.f32.partialorder %v354, 0.0
        %vm1195 = vcmp.ge.f32.partialorder %v355, 0.0
        %vm1196 = vcmp.ge.f32.partialorder %v356, 0.0
        %vm1197 = vcmp.ge.f32.partialorder %v357, 0.0
        %vm1198 = vcmp.ge.f32.partialorder %v358, 0.0
        %vm1199 = vcmp.ge.f32.partialorder %v359, 0.0
        %vm1200 = vcmp.ge.f32.partialorder %v360, 0.0
        %v1201 = vmul.f32 %v442, %v1121
        %v1202 = vmul.f32 %v444, %v1122
        %v1203 = vmul.f32 %v446, %v1123
        %v1204 = vmul.f32 %v448, %v1124
        %v1205 = vmul.f32 %v450, %v1125
        %v1206 = vmul.f32 %v452, %v1126
        %v1207 = vmul.f32 %v454, %v1127
        %v1208 = vmul.f32 %v456, %v1128
        %v1209 = vmul.f32 %v458, %v1129
        %v1210 = vmul.f32 %v460, %v1130
        %v1211 = vmul.f32 %v462, %v1131
        %v1212 = vmul.f32 %v464, %v1132
        %v1213 = vmul.f32 %v466, %v1133
        %v1214 = vmul.f32 %v468, %v1134
        %v1215 = vmul.f32 %v470, %v1135
        %v1216 = vmul.f32 %v472, %v1136
        %v1217 = vmul.f32 %v474, %v1137
        %v1218 = vmul.f32 %v476, %v1138
        %v1219 = vmul.f32 %v478, %v1139
        %v1220 = vmul.f32 %v480, %v1140
        %v1221 = vmul.f32 %v482, %v1141
        %v1222 = vmul.f32 %v484, %v1142
        %v1223 = vmul.f32 %v486, %v1143
        %v1224 = vmul.f32 %v488, %v1144
        %v1225 = vmul.f32 %v490, %v1145
        %v1226 = vmul.f32 %v492, %v1146
        %v1227 = vmul.f32 %v494, %v1147
        %v1228 = vmul.f32 %v496, %v1148
        %v1229 = vmul.f32 %v498, %v1149
        %v1230 = vmul.f32 %v500, %v1150
        %v1231 = vmul.f32 %v502, %v1151
        %v1232 = vmul.f32 %v504, %v1152
        %v1233 = vmul.f32 %v506, %v1153
        %v1234 = vmul.f32 %v508, %v1154
        %v1235 = vmul.f32 %v510, %v1155
        %v1236 = vmul.f32 %v512, %v1156
        %v1237 = vmul.f32 %v514, %v1157
        %v1238 = vmul.f32 %v516, %v1158
        %v1239 = vmul.f32 %v518, %v1159
        %v1240 = vmul.f32 %v520, %v1160
        %v1241 = vsel %vm1161, %v1121, %v1201
        %v1242 = vsel %vm1162, %v1122, %v1202
        %v1243 = vsel %vm1163, %v1123, %v1203
        %v1244 = vsel %vm1164, %v1124, %v1204
        %v1245 = vsel %vm1165, %v1125, %v1205
        %v1246 = vsel %vm1166, %v1126, %v1206
        %v1247 = vsel %vm1167, %v1127, %v1207
        %v1248 = vsel %vm1168, %v1128, %v1208
        %v1249 = vsel %vm1169, %v1129, %v1209
        %v1250 = vsel %vm1170, %v1130, %v1210
        %v1251 = vsel %vm1171, %v1131, %v1211
        %v1252 = vsel %vm1172, %v1132, %v1212
        %v1253 = vsel %vm1173, %v1133, %v1213
        %v1254 = vsel %vm1174, %v1134, %v1214
        %v1255 = vsel %vm1175, %v1135, %v1215
        %v1256 = vsel %vm1176, %v1136, %v1216
        %v1257 = vsel %vm1177, %v1137, %v1217
        %v1258 = vsel %vm1178, %v1138, %v1218
        %v1259 = vsel %vm1179, %v1139, %v1219
        %v1260 = vsel %vm1180, %v1140, %v1220
        %v1261 = vsel %vm1181, %v1141, %v1221
        %v1262 = vsel %vm1182, %v1142, %v1222
        %v1263 = vsel %vm1183, %v1143, %v1223
        %v1264 = vsel %vm1184, %v1144, %v1224
        %v1265 = vsel %vm1185, %v1145, %v1225
        %v1266 = vsel %vm1186, %v1146, %v1226
        %v1267 = vsel %vm1187, %v1147, %v1227
        %v1268 = vsel %vm1188, %v1148, %v1228
        %v1269 = vsel %vm1189, %v1149, %v1229
        %v1270 = vsel %vm1190, %v1150, %v1230
        %v1271 = vsel %vm1191, %v1151, %v1231
        %v1272 = vsel %vm1192, %v1152, %v1232
        %v1273 = vsel %vm1193, %v1153, %v1233
        %v1274 = vsel %vm1194, %v1154, %v1234
        %v1275 = vsel %vm1195, %v1155, %v1235
        %v1276 = vsel %vm1196, %v1156, %v1236
        %v1277 = vsel %vm1197, %v1157, %v1237
        %v1278 = vsel %vm1198, %v1158, %v1238
        %v1279 = vsel %vm1199, %v1159, %v1239
        %v1280 = vsel %vm1200, %v1160, %v1240
        %s1281 = sld [smem:[#allocation3 + $0x3]]
        %p1282 = scmp.gt.f32.partialorder %s1281, 0.5
        %v1283 = vmul.f32 %v1241, %v1241
        %v1284 = vmul.f32 %v1242, %v1242
        %v1285 = vmul.f32 %v1243, %v1243
        %v1286 = vmul.f32 %v1244, %v1244
        %v1287 = vmul.f32 %v1245, %v1245
        %v1288 = vmul.f32 %v1246, %v1246
        %v1289 = vmul.f32 %v1247, %v1247
        %v1290 = vmul.f32 %v1248, %v1248
        %v1291 = vmul.f32 %v1249, %v1249
        %v1292 = vmul.f32 %v1250, %v1250
        %v1293 = vmul.f32 %v1251, %v1251
        %v1294 = vmul.f32 %v1252, %v1252
        %v1295 = vmul.f32 %v1253, %v1253
        %v1296 = vmul.f32 %v1254, %v1254
        %v1297 = vmul.f32 %v1255, %v1255
        %v1298 = vmul.f32 %v1256, %v1256
        %v1299 = vmul.f32 %v1257, %v1257
        %v1300 = vmul.f32 %v1258, %v1258
        %v1301 = vmul.f32 %v1259, %v1259
        %v1302 = vmul.f32 %v1260, %v1260
        %v1303 = vmul.f32 %v1261, %v1261
        %v1304 = vmul.f32 %v1262, %v1262
        %v1305 = vmul.f32 %v1263, %v1263
        %v1306 = vmul.f32 %v1264, %v1264
        %v1307 = vmul.f32 %v1265, %v1265
        %v1308 = vmul.f32 %v1266, %v1266
        %v1309 = vmul.f32 %v1267, %v1267
        %v1310 = vmul.f32 %v1268, %v1268
        %v1311 = vmul.f32 %v1269, %v1269
        %v1312 = vmul.f32 %v1270, %v1270
        %v1313 = vmul.f32 %v1271, %v1271
        %v1314 = vmul.f32 %v1272, %v1272
        %v1315 = vmul.f32 %v1273, %v1273
        %v1316 = vmul.f32 %v1274, %v1274
        %v1317 = vmul.f32 %v1275, %v1275
        %v1318 = vmul.f32 %v1276, %v1276
        %v1319 = vmul.f32 %v1277, %v1277
        %v1320 = vmul.f32 %v1278, %v1278
        %v1321 = vmul.f32 %v1279, %v1279
        %v1322 = vmul.f32 %v1280, %v1280
        %v1323 = vmul.f32 %v1283, 0.75
        %v1324 = vmul.f32 %v1284, 0.75
        %v1325 = vmul.f32 %v1285, 0.75
        %v1326 = vmul.f32 %v1286, 0.75
        %v1327 = vmul.f32 %v1287, 0.75
        %v1328 = vmul.f32 %v1288, 0.75
        %v1329 = vmul.f32 %v1289, 0.75
        %v1330 = vmul.f32 %v1290, 0.75
        %v1331 = vmul.f32 %v1291, 0.75
        %v1332 = vmul.f32 %v1292, 0.75
        %v1333 = vmul.f32 %v1293, 0.75
        %v1334 = vmul.f32 %v1294, 0.75
        %v1335 = vmul.f32 %v1295, 0.75
        %v1336 = vmul.f32 %v1296, 0.75
        %v1337 = vmul.f32 %v1297, 0.75
        %v1338 = vmul.f32 %v1298, 0.75
        %v1339 = vmul.f32 %v1299, 0.75
        %v1340 = vmul.f32 %v1300, 0.75
        %v1341 = vmul.f32 %v1301, 0.75
        %v1342 = vmul.f32 %v1302, 0.75
        %v1343 = vmul.f32 %v1303, 0.75
        %v1344 = vmul.f32 %v1304, 0.75
        %v1345 = vmul.f32 %v1305, 0.75
        %v1346 = vmul.f32 %v1306, 0.75
        %v1347 = vmul.f32 %v1307, 0.75
        %v1348 = vmul.f32 %v1308, 0.75
        %v1349 = vmul.f32 %v1309, 0.75
        %v1350 = vmul.f32 %v1310, 0.75
        %v1351 = vmul.f32 %v1311, 0.75
        %v1352 = vmul.f32 %v1312, 0.75
        %v1353 = vmul.f32 %v1313, 0.75
        %v1354 = vmul.f32 %v1314, 0.75
        %v1355 = vmul.f32 %v1315, 0.75
        %v1356 = vmul.f32 %v1316, 0.75
        %v1357 = vmul.f32 %v1317, 0.75
        %v1358 = vmul.f32 %v1318, 0.75
        %v1359 = vmul.f32 %v1319, 0.75
        %v1360 = vmul.f32 %v1320, 0.75
        %v1361 = vmul.f32 %v1321, 0.75
        %v1362 = vmul.f32 %v1322, 0.75
        %v1363 = vrsqrt.pop %v1241
        %v1364 = vmul.f32 %v1241, %v1363
        %vm1365 = vcmp.eq.f32.partialorder %v1241, inf
        %v1366 = vsel %vm1365, %v1241, %v1364
        %vm1367 = vcmp.eq.f32.partialorder %v1241, 0.0
        %v1368 = vand.u32 %v1241, 2147483648
        %v1369 = vsel %vm1367, %v1368, %v1366
        %v1370 = vrsqrt.pop %v1242
        %v1371 = vmul.f32 %v1242, %v1370
        %vm1372 = vcmp.eq.f32.partialorder %v1242, inf
        %v1373 = vsel %vm1372, %v1242, %v1371
        %vm1374 = vcmp.eq.f32.partialorder %v1242, 0.0
        %v1375 = vand.u32 %v1242, 2147483648
        %v1376 = vsel %vm1374, %v1375, %v1373
        %v1377 = vrsqrt.pop %v1243
        %v1378 = vmul.f32 %v1243, %v1377
        %vm1379 = vcmp.eq.f32.partialorder %v1243, inf
        %v1380 = vsel %vm1379, %v1243, %v1378
        %vm1381 = vcmp.eq.f32.partialorder %v1243, 0.0
        %v1382 = vand.u32 %v1243, 2147483648
        %v1383 = vsel %vm1381, %v1382, %v1380
        %v1384 = vrsqrt.pop %v1244
        %v1385 = vmul.f32 %v1244, %v1384
        %vm1386 = vcmp.eq.f32.partialorder %v1244, inf
        %v1387 = vsel %vm1386, %v1244, %v1385
        %vm1388 = vcmp.eq.f32.partialorder %v1244, 0.0
        %v1389 = vand.u32 %v1244, 2147483648
        %v1390 = vsel %vm1388, %v1389, %v1387
        %v1391 = vrsqrt.pop %v1245
        %v1392 = vmul.f32 %v1245, %v1391
        %vm1393 = vcmp.eq.f32.partialorder %v1245, inf
        %v1394 = vsel %vm1393, %v1245, %v1392
        %vm1395 = vcmp.eq.f32.partialorder %v1245, 0.0
        %v1396 = vand.u32 %v1245, 2147483648
        %v1397 = vsel %vm1395, %v1396, %v1394
        %v1398 = vrsqrt.pop %v1246
        %v1399 = vmul.f32 %v1246, %v1398
        %vm1400 = vcmp.eq.f32.partialorder %v1246, inf
        %v1401 = vsel %vm1400, %v1246, %v1399
        %vm1402 = vcmp.eq.f32.partialorder %v1246, 0.0
        %v1403 = vand.u32 %v1246, 2147483648
        %v1404 = vsel %vm1402, %v1403, %v1401
        %v1405 = vrsqrt.pop %v1247
        %v1406 = vmul.f32 %v1247, %v1405
        %vm1407 = vcmp.eq.f32.partialorder %v1247, inf
        %v1408 = vsel %vm1407, %v1247, %v1406
        %vm1409 = vcmp.eq.f32.partialorder %v1247, 0.0
        %v1410 = vand.u32 %v1247, 2147483648
        %v1411 = vsel %vm1409, %v1410, %v1408
        %v1412 = vrsqrt.pop %v1248
        %v1413 = vmul.f32 %v1248, %v1412
        %vm1414 = vcmp.eq.f32.partialorder %v1248, inf
        %v1415 = vsel %vm1414, %v1248, %v1413
        %vm1416 = vcmp.eq.f32.partialorder %v1248, 0.0
        %v1417 = vand.u32 %v1248, 2147483648
        %v1418 = vsel %vm1416, %v1417, %v1415
        %v1419 = vrsqrt.pop %v1249
        %v1420 = vmul.f32 %v1249, %v1419
        %vm1421 = vcmp.eq.f32.partialorder %v1249, inf
        %v1422 = vsel %vm1421, %v1249, %v1420
        %vm1423 = vcmp.eq.f32.partialorder %v1249, 0.0
        %v1424 = vand.u32 %v1249, 2147483648
        %v1425 = vsel %vm1423, %v1424, %v1422
        %v1426 = vrsqrt.pop %v1250
        %v1427 = vmul.f32 %v1250, %v1426
        %vm1428 = vcmp.eq.f32.partialorder %v1250, inf
        %v1429 = vsel %vm1428, %v1250, %v1427
        %vm1430 = vcmp.eq.f32.partialorder %v1250, 0.0
        %v1431 = vand.u32 %v1250, 2147483648
        %v1432 = vsel %vm1430, %v1431, %v1429
        %v1433 = vrsqrt.pop %v1251
        %v1434 = vmul.f32 %v1251, %v1433
        %vm1435 = vcmp.eq.f32.partialorder %v1251, inf
        %v1436 = vsel %vm1435, %v1251, %v1434
        %vm1437 = vcmp.eq.f32.partialorder %v1251, 0.0
        %v1438 = vand.u32 %v1251, 2147483648
        %v1439 = vsel %vm1437, %v1438, %v1436
        %v1440 = vrsqrt.pop %v1252
        %v1441 = vmul.f32 %v1252, %v1440
        %vm1442 = vcmp.eq.f32.partialorder %v1252, inf
        %v1443 = vsel %vm1442, %v1252, %v1441
        %vm1444 = vcmp.eq.f32.partialorder %v1252, 0.0
        %v1445 = vand.u32 %v1252, 2147483648
        %v1446 = vsel %vm1444, %v1445, %v1443
        %v1447 = vrsqrt.pop %v1253
        %v1448 = vmul.f32 %v1253, %v1447
        %vm1449 = vcmp.eq.f32.partialorder %v1253, inf
        %v1450 = vsel %vm1449, %v1253, %v1448
        %vm1451 = vcmp.eq.f32.partialorder %v1253, 0.0
        %v1452 = vand.u32 %v1253, 2147483648
        %v1453 = vsel %vm1451, %v1452, %v1450
        %v1454 = vrsqrt.pop %v1254
        %v1455 = vmul.f32 %v1254, %v1454
        %vm1456 = vcmp.eq.f32.partialorder %v1254, inf
        %v1457 = vsel %vm1456, %v1254, %v1455
        %vm1458 = vcmp.eq.f32.partialorder %v1254, 0.0
        %v1459 = vand.u32 %v1254, 2147483648
        %v1460 = vsel %vm1458, %v1459, %v1457
        %v1461 = vrsqrt.pop %v1255
        %v1462 = vmul.f32 %v1255, %v1461
        %vm1463 = vcmp.eq.f32.partialorder %v1255, inf
        %v1464 = vsel %vm1463, %v1255, %v1462
        %vm1465 = vcmp.eq.f32.partialorder %v1255, 0.0
        %v1466 = vand.u32 %v1255, 2147483648
        %v1467 = vsel %vm1465, %v1466, %v1464
        %v1468 = vrsqrt.pop %v1256
        %v1469 = vmul.f32 %v1256, %v1468
        %vm1470 = vcmp.eq.f32.partialorder %v1256, inf
        %v1471 = vsel %vm1470, %v1256, %v1469
        %vm1472 = vcmp.eq.f32.partialorder %v1256, 0.0
        %v1473 = vand.u32 %v1256, 2147483648
        %v1474 = vsel %vm1472, %v1473, %v1471
        %v1475 = vrsqrt.pop %v1257
        %v1476 = vmul.f32 %v1257, %v1475
        %vm1477 = vcmp.eq.f32.partialorder %v1257, inf
        %v1478 = vsel %vm1477, %v1257, %v1476
        %vm1479 = vcmp.eq.f32.partialorder %v1257, 0.0
        %v1480 = vand.u32 %v1257, 2147483648
        %v1481 = vsel %vm1479, %v1480, %v1478
        %v1482 = vrsqrt.pop %v1258
        %v1483 = vmul.f32 %v1258, %v1482
        %vm1484 = vcmp.eq.f32.partialorder %v1258, inf
        %v1485 = vsel %vm1484, %v1258, %v1483
        %vm1486 = vcmp.eq.f32.partialorder %v1258, 0.0
        %v1487 = vand.u32 %v1258, 2147483648
        %v1488 = vsel %vm1486, %v1487, %v1485
        %v1489 = vrsqrt.pop %v1259
        %v1490 = vmul.f32 %v1259, %v1489
        %vm1491 = vcmp.eq.f32.partialorder %v1259, inf
        %v1492 = vsel %vm1491, %v1259, %v1490
        %vm1493 = vcmp.eq.f32.partialorder %v1259, 0.0
        %v1494 = vand.u32 %v1259, 2147483648
        %v1495 = vsel %vm1493, %v1494, %v1492
        %v1496 = vrsqrt.pop %v1260
        %v1497 = vmul.f32 %v1260, %v1496
        %vm1498 = vcmp.eq.f32.partialorder %v1260, inf
        %v1499 = vsel %vm1498, %v1260, %v1497
        %vm1500 = vcmp.eq.f32.partialorder %v1260, 0.0
        %v1501 = vand.u32 %v1260, 2147483648
        %v1502 = vsel %vm1500, %v1501, %v1499
        %v1503 = vrsqrt.pop %v1261
        %v1504 = vmul.f32 %v1261, %v1503
        %vm1505 = vcmp.eq.f32.partialorder %v1261, inf
        %v1506 = vsel %vm1505, %v1261, %v1504
        %vm1507 = vcmp.eq.f32.partialorder %v1261, 0.0
        %v1508 = vand.u32 %v1261, 2147483648
        %v1509 = vsel %vm1507, %v1508, %v1506
        %v1510 = vrsqrt.pop %v1262
        %v1511 = vmul.f32 %v1262, %v1510
        %vm1512 = vcmp.eq.f32.partialorder %v1262, inf
        %v1513 = vsel %vm1512, %v1262, %v1511
        %vm1514 = vcmp.eq.f32.partialorder %v1262, 0.0
        %v1515 = vand.u32 %v1262, 2147483648
        %v1516 = vsel %vm1514, %v1515, %v1513
        %v1517 = vrsqrt.pop %v1263
        %v1518 = vmul.f32 %v1263, %v1517
        %vm1519 = vcmp.eq.f32.partialorder %v1263, inf
        %v1520 = vsel %vm1519, %v1263, %v1518
        %vm1521 = vcmp.eq.f32.partialorder %v1263, 0.0
        %v1522 = vand.u32 %v1263, 2147483648
        %v1523 = vsel %vm1521, %v1522, %v1520
        %v1524 = vrsqrt.pop %v1264
        %v1525 = vmul.f32 %v1264, %v1524
        %vm1526 = vcmp.eq.f32.partialorder %v1264, inf
        %v1527 = vsel %vm1526, %v1264, %v1525
        %vm1528 = vcmp.eq.f32.partialorder %v1264, 0.0
        %v1529 = vand.u32 %v1264, 2147483648
        %v1530 = vsel %vm1528, %v1529, %v1527
        %v1531 = vrsqrt.pop %v1265
        %v1532 = vmul.f32 %v1265, %v1531
        %vm1533 = vcmp.eq.f32.partialorder %v1265, inf
        %v1534 = vsel %vm1533, %v1265, %v1532
        %vm1535 = vcmp.eq.f32.partialorder %v1265, 0.0
        %v1536 = vand.u32 %v1265, 2147483648
        %v1537 = vsel %vm1535, %v1536, %v1534
        %v1538 = vrsqrt.pop %v1266
        %v1539 = vmul.f32 %v1266, %v1538
        %vm1540 = vcmp.eq.f32.partialorder %v1266, inf
        %v1541 = vsel %vm1540, %v1266, %v1539
        %vm1542 = vcmp.eq.f32.partialorder %v1266, 0.0
        %v1543 = vand.u32 %v1266, 2147483648
        %v1544 = vsel %vm1542, %v1543, %v1541
        %v1545 = vrsqrt.pop %v1267
        %v1546 = vmul.f32 %v1267, %v1545
        %vm1547 = vcmp.eq.f32.partialorder %v1267, inf
        %v1548 = vsel %vm1547, %v1267, %v1546
        %vm1549 = vcmp.eq.f32.partialorder %v1267, 0.0
        %v1550 = vand.u32 %v1267, 2147483648
        %v1551 = vsel %vm1549, %v1550, %v1548
        %v1552 = vrsqrt.pop %v1268
        %v1553 = vmul.f32 %v1268, %v1552
        %vm1554 = vcmp.eq.f32.partialorder %v1268, inf
        %v1555 = vsel %vm1554, %v1268, %v1553
        %vm1556 = vcmp.eq.f32.partialorder %v1268, 0.0
        %v1557 = vand.u32 %v1268, 2147483648
        %v1558 = vsel %vm1556, %v1557, %v1555
        %v1559 = vrsqrt.pop %v1269
        %v1560 = vmul.f32 %v1269, %v1559
        %vm1561 = vcmp.eq.f32.partialorder %v1269, inf
        %v1562 = vsel %vm1561, %v1269, %v1560
        %vm1563 = vcmp.eq.f32.partialorder %v1269, 0.0
        %v1564 = vand.u32 %v1269, 2147483648
        %v1565 = vsel %vm1563, %v1564, %v1562
        %v1566 = vrsqrt.pop %v1270
        %v1567 = vmul.f32 %v1270, %v1566
        %vm1568 = vcmp.eq.f32.partialorder %v1270, inf
        %v1569 = vsel %vm1568, %v1270, %v1567
        %vm1570 = vcmp.eq.f32.partialorder %v1270, 0.0
        %v1571 = vand.u32 %v1270, 2147483648
        %v1572 = vsel %vm1570, %v1571, %v1569
        %v1573 = vrsqrt.pop %v1271
        %v1574 = vmul.f32 %v1271, %v1573
        %vm1575 = vcmp.eq.f32.partialorder %v1271, inf
        %v1576 = vsel %vm1575, %v1271, %v1574
        %vm1577 = vcmp.eq.f32.partialorder %v1271, 0.0
        %v1578 = vand.u32 %v1271, 2147483648
        %v1579 = vsel %vm1577, %v1578, %v1576
        %v1580 = vrsqrt.pop %v1272
        %v1581 = vmul.f32 %v1272, %v1580
        %vm1582 = vcmp.eq.f32.partialorder %v1272, inf
        %v1583 = vsel %vm1582, %v1272, %v1581
        %vm1584 = vcmp.eq.f32.partialorder %v1272, 0.0
        %v1585 = vand.u32 %v1272, 2147483648
        %v1586 = vsel %vm1584, %v1585, %v1583
        %v1587 = vrsqrt.pop %v1273
        %v1588 = vmul.f32 %v1273, %v1587
        %vm1589 = vcmp.eq.f32.partialorder %v1273, inf
        %v1590 = vsel %vm1589, %v1273, %v1588
        %vm1591 = vcmp.eq.f32.partialorder %v1273, 0.0
        %v1592 = vand.u32 %v1273, 2147483648
        %v1593 = vsel %vm1591, %v1592, %v1590
        %v1594 = vrsqrt.pop %v1274
        %v1595 = vmul.f32 %v1274, %v1594
        %vm1596 = vcmp.eq.f32.partialorder %v1274, inf
        %v1597 = vsel %vm1596, %v1274, %v1595
        %vm1598 = vcmp.eq.f32.partialorder %v1274, 0.0
        %v1599 = vand.u32 %v1274, 2147483648
        %v1600 = vsel %vm1598, %v1599, %v1597
        %v1601 = vrsqrt.pop %v1275
        %v1602 = vmul.f32 %v1275, %v1601
        %vm1603 = vcmp.eq.f32.partialorder %v1275, inf
        %v1604 = vsel %vm1603, %v1275, %v1602
        %vm1605 = vcmp.eq.f32.partialorder %v1275, 0.0
        %v1606 = vand.u32 %v1275, 2147483648
        %v1607 = vsel %vm1605, %v1606, %v1604
        %v1608 = vrsqrt.pop %v1276
        %v1609 = vmul.f32 %v1276, %v1608
        %vm1610 = vcmp.eq.f32.partialorder %v1276, inf
        %v1611 = vsel %vm1610, %v1276, %v1609
        %vm1612 = vcmp.eq.f32.partialorder %v1276, 0.0
        %v1613 = vand.u32 %v1276, 2147483648
        %v1614 = vsel %vm1612, %v1613, %v1611
        %v1615 = vrsqrt.pop %v1277
        %v1616 = vmul.f32 %v1277, %v1615
        %vm1617 = vcmp.eq.f32.partialorder %v1277, inf
        %v1618 = vsel %vm1617, %v1277, %v1616
        %vm1619 = vcmp.eq.f32.partialorder %v1277, 0.0
        %v1620 = vand.u32 %v1277, 2147483648
        %v1621 = vsel %vm1619, %v1620, %v1618
        %v1622 = vrsqrt.pop %v1278
        %v1623 = vmul.f32 %v1278, %v1622
        %vm1624 = vcmp.eq.f32.partialorder %v1278, inf
        %v1625 = vsel %vm1624, %v1278, %v1623
        %vm1626 = vcmp.eq.f32.partialorder %v1278, 0.0
        %v1627 = vand.u32 %v1278, 2147483648
        %v1628 = vsel %vm1626, %v1627, %v1625
        %v1629 = vrsqrt.pop %v1279
        %v1630 = vmul.f32 %v1279, %v1629
        %vm1631 = vcmp.eq.f32.partialorder %v1279, inf
        %v1632 = vsel %vm1631, %v1279, %v1630
        %vm1633 = vcmp.eq.f32.partialorder %v1279, 0.0
        %v1634 = vand.u32 %v1279, 2147483648
        %v1635 = vsel %vm1633, %v1634, %v1632
        %v1636 = vrsqrt.pop %v1280
        %v1637 = vmul.f32 %v1280, %v1636
        %vm1638 = vcmp.eq.f32.partialorder %v1280, inf
        %v1639 = vsel %vm1638, %v1280, %v1637
        %vm1640 = vcmp.eq.f32.partialorder %v1280, 0.0
        %v1641 = vand.u32 %v1280, 2147483648
        %v1642 = vsel %vm1640, %v1641, %v1639
        %v1643 = vmul.f32 %v1241, %v1369
        %v1644 = vmul.f32 %v1242, %v1376
        %v1645 = vmul.f32 %v1243, %v1383
        %v1646 = vmul.f32 %v1244, %v1390
        %v1647 = vmul.f32 %v1245, %v1397
        %v1648 = vmul.f32 %v1246, %v1404
        %v1649 = vmul.f32 %v1247, %v1411
        %v1650 = vmul.f32 %v1248, %v1418
        %v1651 = vmul.f32 %v1249, %v1425
        %v1652 = vmul.f32 %v1250, %v1432
        %v1653 = vmul.f32 %v1251, %v1439
        %v1654 = vmul.f32 %v1252, %v1446
        %v1655 = vmul.f32 %v1253, %v1453
        %v1656 = vmul.f32 %v1254, %v1460
        %v1657 = vmul.f32 %v1255, %v1467
        %v1658 = vmul.f32 %v1256, %v1474
        %v1659 = vmul.f32 %v1257, %v1481
        %v1660 = vmul.f32 %v1258, %v1488
        %v1661 = vmul.f32 %v1259, %v1495
        %v1662 = vmul.f32 %v1260, %v1502
        %v1663 = vmul.f32 %v1261, %v1509
        %v1664 = vmul.f32 %v1262, %v1516
        %v1665 = vmul.f32 %v1263, %v1523
        %v1666 = vmul.f32 %v1264, %v1530
        %v1667 = vmul.f32 %v1265, %v1537
        %v1668 = vmul.f32 %v1266, %v1544
        %v1669 = vmul.f32 %v1267, %v1551
        %v1670 = vmul.f32 %v1268, %v1558
        %v1671 = vmul.f32 %v1269, %v1565
        %v1672 = vmul.f32 %v1270, %v1572
        %v1673 = vmul.f32 %v1271, %v1579
        %v1674 = vmul.f32 %v1272, %v1586
        %v1675 = vmul.f32 %v1273, %v1593
        %v1676 = vmul.f32 %v1274, %v1600
        %v1677 = vmul.f32 %v1275, %v1607
        %v1678 = vmul.f32 %v1276, %v1614
        %v1679 = vmul.f32 %v1277, %v1621
        %v1680 = vmul.f32 %v1278, %v1628
        %v1681 = vmul.f32 %v1279, %v1635
        %v1682 = vmul.f32 %v1280, %v1642
        %v1683 = vmul.f32 %v1643, 0.75
        %v1684 = vmul.f32 %v1644, 0.75
        %v1685 = vmul.f32 %v1645, 0.75
        %v1686 = vmul.f32 %v1646, 0.75
        %v1687 = vmul.f32 %v1647, 0.75
        %v1688 = vmul.f32 %v1648, 0.75
        %v1689 = vmul.f32 %v1649, 0.75
        %v1690 = vmul.f32 %v1650, 0.75
        %v1691 = vmul.f32 %v1651, 0.75
        %v1692 = vmul.f32 %v1652, 0.75
        %v1693 = vmul.f32 %v1653, 0.75
        %v1694 = vmul.f32 %v1654, 0.75
        %v1695 = vmul.f32 %v1655, 0.75
        %v1696 = vmul.f32 %v1656, 0.75
        %v1697 = vmul.f32 %v1657, 0.75
        %v1698 = vmul.f32 %v1658, 0.75
        %v1699 = vmul.f32 %v1659, 0.75
        %v1700 = vmul.f32 %v1660, 0.75
        %v1701 = vmul.f32 %v1661, 0.75
        %v1702 = vmul.f32 %v1662, 0.75
        %v1703 = vmul.f32 %v1663, 0.75
        %v1704 = vmul.f32 %v1664, 0.75
        %v1705 = vmul.f32 %v1665, 0.75
        %v1706 = vmul.f32 %v1666, 0.75
        %v1707 = vmul.f32 %v1667, 0.75
        %v1708 = vmul.f32 %v1668, 0.75
        %v1709 = vmul.f32 %v1669, 0.75
        %v1710 = vmul.f32 %v1670, 0.75
        %v1711 = vmul.f32 %v1671, 0.75
        %v1712 = vmul.f32 %v1672, 0.75
        %v1713 = vmul.f32 %v1673, 0.75
        %v1714 = vmul.f32 %v1674, 0.75
        %v1715 = vmul.f32 %v1675, 0.75
        %v1716 = vmul.f32 %v1676, 0.75
        %v1717 = vmul.f32 %v1677, 0.75
        %v1718 = vmul.f32 %v1678, 0.75
        %v1719 = vmul.f32 %v1679, 0.75
        %v1720 = vmul.f32 %v1680, 0.75
        %v1721 = vmul.f32 %v1681, 0.75
        %v1722 = vmul.f32 %v1682, 0.75
        %s1723 = scalar_select %p1282, 1, 0
        %v1724 = vstv %s1723
        %vm1725 = vcmp.eq.s32.totalorder %v1724, 1
        %v1726 = vsel %vm1725, %v1323, %v1683
        %v1727 = vsel %vm1725, %v1324, %v1684
        %v1728 = vsel %vm1725, %v1325, %v1685
        %v1729 = vsel %vm1725, %v1326, %v1686
        %v1730 = vsel %vm1725, %v1327, %v1687
        %v1731 = vsel %vm1725, %v1328, %v1688
        %v1732 = vsel %vm1725, %v1329, %v1689
        %v1733 = vsel %vm1725, %v1330, %v1690
        %v1734 = vsel %vm1725, %v1331, %v1691
        %v1735 = vsel %vm1725, %v1332, %v1692
        %v1736 = vsel %vm1725, %v1333, %v1693
        %v1737 = vsel %vm1725, %v1334, %v1694
        %v1738 = vsel %vm1725, %v1335, %v1695
        %v1739 = vsel %vm1725, %v1336, %v1696
        %v1740 = vsel %vm1725, %v1337, %v1697
        %v1741 = vsel %vm1725, %v1338, %v1698
        %v1742 = vsel %vm1725, %v1339, %v1699
        %v1743 = vsel %vm1725, %v1340, %v1700
        %v1744 = vsel %vm1725, %v1341, %v1701
        %v1745 = vsel %vm1725, %v1342, %v1702
        %v1746 = vsel %vm1725, %v1343, %v1703
        %v1747 = vsel %vm1725, %v1344, %v1704
        %v1748 = vsel %vm1725, %v1345, %v1705
        %v1749 = vsel %vm1725, %v1346, %v1706
        %v1750 = vsel %vm1725, %v1347, %v1707
        %v1751 = vsel %vm1725, %v1348, %v1708
        %v1752 = vsel %vm1725, %v1349, %v1709
        %v1753 = vsel %vm1725, %v1350, %v1710
        %v1754 = vsel %vm1725, %v1351, %v1711
        %v1755 = vsel %vm1725, %v1352, %v1712
        %v1756 = vsel %vm1725, %v1353, %v1713
        %v1757 = vsel %vm1725, %v1354, %v1714
        %v1758 = vsel %vm1725, %v1355, %v1715
        %v1759 = vsel %vm1725, %v1356, %v1716
        %v1760 = vsel %vm1725, %v1357, %v1717
        %v1761 = vsel %vm1725, %v1358, %v1718
        %v1762 = vsel %vm1725, %v1359, %v1719
        %v1763 = vsel %vm1725, %v1360, %v1720
        %v1764 = vsel %vm1725, %v1361, %v1721
        %v1765 = vsel %vm1725, %v1362, %v1722
        %v1766 = vmul.f32 %v921, %v1726
        %v1767 = vmul.f32 %v922, %v1727
        %v1768 = vmul.f32 %v923, %v1728
        %v1769 = vmul.f32 %v924, %v1729
        %v1770 = vmul.f32 %v925, %v1730
        %v1771 = vmul.f32 %v926, %v1731
        %v1772 = vmul.f32 %v927, %v1732
        %v1773 = vmul.f32 %v928, %v1733
        %v1774 = vmul.f32 %v929, %v1734
        %v1775 = vmul.f32 %v930, %v1735
        %v1776 = vmul.f32 %v931, %v1736
        %v1777 = vmul.f32 %v932, %v1737
        %v1778 = vmul.f32 %v933, %v1738
        %v1779 = vmul.f32 %v934, %v1739
        %v1780 = vmul.f32 %v935, %v1740
        %v1781 = vmul.f32 %v936, %v1741
        %v1782 = vmul.f32 %v937, %v1742
        %v1783 = vmul.f32 %v938, %v1743
        %v1784 = vmul.f32 %v939, %v1744
        %v1785 = vmul.f32 %v940, %v1745
        %v1786 = vmul.f32 %v941, %v1746
        %v1787 = vmul.f32 %v942, %v1747
        %v1788 = vmul.f32 %v943, %v1748
        %v1789 = vmul.f32 %v944, %v1749
        %v1790 = vmul.f32 %v945, %v1750
        %v1791 = vmul.f32 %v946, %v1751
        %v1792 = vmul.f32 %v947, %v1752
        %v1793 = vmul.f32 %v948, %v1753
        %v1794 = vmul.f32 %v949, %v1754
        %v1795 = vmul.f32 %v950, %v1755
        %v1796 = vmul.f32 %v951, %v1756
        %v1797 = vmul.f32 %v952, %v1757
        %v1798 = vmul.f32 %v953, %v1758
        %v1799 = vmul.f32 %v954, %v1759
        %v1800 = vmul.f32 %v955, %v1760
        %v1801 = vmul.f32 %v956, %v1761
        %v1802 = vmul.f32 %v957, %v1762
        %v1803 = vmul.f32 %v958, %v1763
        %v1804 = vmul.f32 %v959, %v1764
        %v1805 = vmul.f32 %v960, %v1765
        %p1806 = scmp.eq.s32.totalorder %s23, 0
        // Predicated region
        $region49: #{detr_loss_forward.1} parent=43 // pred_check
          %p1807 = pneg %p1806
        $region50: #{detr_loss_forward.1} parent=43 // pred_check_branch
          %1809 = sbr.rel (%p1807) target = $region52
        $region51: #{detr_loss_forward.1} parent=43 // pred_region
          %1810 = vst [vmem:[#allocation2] sm:$0xff] 0.0
        $region52: #{detr_loss_forward.1} parent=43 // pred_fallthru
          _
        %v1811 = vld [vmem:[#allocation2] sm:$0xff]
        %vm1812 = vcmask 523264
        %v1814 = vsel %vm1812, 1.0, 0
        %1816 = vmatprep.subr.mxu0 0.0
        %1817 = vmatpush1.msra.mxu0 %v1766
        %1818 = vmatprep.subr.mxu0 0.0
        %1819 = vmatpush1.msra.mxu0 %v1767
        %1820 = vmatprep.subr.mxu0 0.0
        %1821 = vmatpush1.msra.mxu0 %v1768
        %1822 = vmatprep.subr.mxu0 0.0
        %1823 = vmatpush1.msra.mxu0 %v1769
        %1824 = vmatprep.subr.mxu0 0.0
        %1825 = vmatpush1.msra.mxu0 %v1770
        %1826 = vmatprep.subr.mxu0 0.0
        %1827 = vmatpush1.msra.mxu0 %v1771
        %1828 = vmatprep.subr.mxu0 0.0
        %1829 = vmatpush1.msra.mxu0 %v1772
        %1830 = vmatprep.subr.mxu0 0.0
        %1831 = vmatpush1.msra.mxu0 %v1773
        %1832 = vmatprep.subr.mxu0 0.0
        %1833 = vmatpush1.msra.mxu0 %v1774
        %1834 = vmatprep.subr.mxu0 0.0
        %1835 = vmatpush1.msra.mxu0 %v1775
        %1836 = vmatprep.subr.mxu0 0.0
        %1837 = vmatpush1.msra.mxu0 %v1776
        %1838 = vmatprep.subr.mxu0 0.0
        %1839 = vmatpush1.msra.mxu0 %v1777
        %1840 = vmatprep.subr.mxu0 0.0
        %1841 = vmatpush1.msra.mxu0 %v1778
        %1842 = vmatprep.subr.mxu0 0.0
        %1843 = vmatpush1.msra.mxu0 %v1779
        %1844 = vmatprep.subr.mxu0 0.0
        %1845 = vmatpush1.msra.mxu0 %v1780
        %1846 = vmatprep.subr.mxu0 0.0
        %1847 = vmatpush1.msra.mxu0 %v1781
        %1848 = vmatprep.subr.mxu0 0.0
        %1849 = vmatpush1.msra.mxu0 %v1782
        %1850 = vmatprep.subr.mxu0 0.0
        %1851 = vmatpush1.msra.mxu0 %v1783
        %1852 = vmatprep.subr.mxu0 0.0
        %1853 = vmatpush1.msra.mxu0 %v1784
        %1854 = vmatprep.subr.mxu0 0.0
        %1855 = vmatpush1.msra.mxu0 %v1785
        %1856 = vmatprep.subr.mxu0 0.0
        %1857 = vmatpush1.msra.mxu0 %v1786
        %1858 = vmatprep.subr.mxu0 0.0
        %1859 = vmatpush1.msra.mxu0 %v1787
        %1860 = vmatprep.subr.mxu0 0.0
        %1861 = vmatpush1.msra.mxu0 %v1788
        %1862 = vmatprep.subr.mxu0 0.0
        %1863 = vmatpush1.msra.mxu0 %v1789
        %1864 = vmatprep.subr.mxu0 0.0
        %1865 = vmatpush1.msra.mxu0 %v1790
        %1866 = vmatprep.subr.mxu0 0.0
        %1867 = vmatpush1.msra.mxu0 %v1791
        %1868 = vmatprep.subr.mxu0 0.0
        %1869 = vmatpush1.msra.mxu0 %v1792
        %1870 = vmatprep.subr.mxu0 0.0
        %1871 = vmatpush1.msra.mxu0 %v1793
        %1872 = vmatprep.subr.mxu0 0.0
        %1873 = vmatpush1.msra.mxu0 %v1794
        %1874 = vmatprep.subr.mxu0 0.0
        %1875 = vmatpush1.msra.mxu0 %v1795
        %1876 = vmatprep.subr.mxu0 0.0
        %1877 = vmatpush1.msra.mxu0 %v1796
        %1878 = vmatprep.subr.mxu0 0.0
        %1879 = vmatpush1.msra.mxu0 %v1797
        %1880 = vmatprep.mubr.f32.mxu0 1.0
        %1881 = vmatmul.mubr.f32.gmra.mrb[0].mxu0 1.0
        %v1882 = vpop.f32.mrb[0].mxu0
        %v1883 = vadd.f32 0.0, %v1882
        %v1884 = vpop.f32.mrb[0].mxu0
        %1885 = vdwg.mxu0
        %1886 = vmatprep.subr.mxu0 0.0
        %1887 = vmatpush1.msra.mxu0 %v1798
        %1888 = vmatprep.subr.mxu0 0.0
        %1889 = vmatpush1.msra.mxu0 %v1799
        %1890 = vmatprep.subr.mxu0 0.0
        %1891 = vmatpush1.msra.mxu0 %v1800
        %1892 = vmatprep.subr.mxu0 0.0
        %1893 = vmatpush1.msra.mxu0 %v1801
        %1894 = vmatprep.subr.mxu0 0.0
        %1895 = vmatpush1.msra.mxu0 %v1802
        %1896 = vmatprep.subr.mxu0 0.0
        %1897 = vmatpush1.msra.mxu0 %v1803
        %1898 = vmatprep.subr.mxu0 0.0
        %1899 = vmatpush1.msra.mxu0 %v1804
        %1900 = vmatprep.subr.mxu0 0.0
        %1901 = vmatpush1.msra.mxu0 %v1805
        %1902 = vmatprep.subr.mxu0 0.0
        %1903 = vmatpush1.msra.mxu0 0.0
        %1904 = vmatprep.subr.mxu0 0.0
        %1905 = vmatpush1.msra.mxu0 0.0
        %1906 = vmatprep.subr.mxu0 0.0
        %1907 = vmatpush1.msra.mxu0 0.0
        %1908 = vmatprep.subr.mxu0 0.0
        %1909 = vmatpush1.msra.mxu0 0.0
        %1910 = vmatprep.subr.mxu0 0.0
        %1911 = vmatpush1.msra.mxu0 0.0
        %1912 = vmatprep.subr.mxu0 0.0
        %1913 = vmatpush1.msra.mxu0 0.0
        %1914 = vmatprep.subr.mxu0 0.0
        %1915 = vmatpush1.msra.mxu0 0.0
        %1916 = vmatprep.subr.mxu0 0.0
        %1917 = vmatpush1.msra.mxu0 0.0
        %1918 = vmatprep.subr.mxu0 0.0
        %1919 = vmatpush1.msra.mxu0 0.0
        %1920 = vmatprep.subr.mxu0 0.0
        %1921 = vmatpush1.msra.mxu0 0.0
        %1922 = vmatprep.subr.mxu0 0.0
        %1923 = vmatpush1.msra.mxu0 0.0
        %1924 = vmatprep.subr.mxu0 0.0
        %1925 = vmatpush1.msra.mxu0 0.0
        %1926 = vmatprep.subr.mxu0 0.0
        %1927 = vmatpush1.msra.mxu0 0.0
        %1928 = vmatprep.subr.mxu0 0.0
        %1929 = vmatpush1.msra.mxu0 0.0
        %1930 = vmatprep.subr.mxu0 0.0
        %1931 = vmatpush1.msra.mxu0 0.0
        %1932 = vmatprep.subr.mxu0 0.0
        %1933 = vmatpush1.msra.mxu0 0.0
        %1934 = vmatprep.subr.mxu0 0.0
        %1935 = vmatpush1.msra.mxu0 0.0
        %1936 = vmatprep.subr.mxu0 0.0
        %1937 = vmatpush1.msra.mxu0 0.0
        %1938 = vmatprep.subr.mxu0 0.0
        %1939 = vmatpush1.msra.mxu0 0.0
        %1940 = vmatprep.subr.mxu0 0.0
        %1941 = vmatpush1.msra.mxu0 0.0
        %1942 = vmatprep.subr.mxu0 0.0
        %1943 = vmatpush1.msra.mxu0 0.0
        %1944 = vmatprep.subr.mxu0 0.0
        %1945 = vmatpush1.msra.mxu0 0.0
        %1946 = vmatprep.subr.mxu0 0.0
        %1947 = vmatpush1.msra.mxu0 0.0
        %1948 = vmatprep.subr.mxu0 0.0
        %1949 = vmatpush1.msra.mxu0 0.0
        %1950 = vmatprep.mubr.f32.mxu0 0.0
        %1951 = vmatmul.mubr.f32.gmra.mrb[0].mxu0 %v1814
        %v1952 = vpop.f32.mrb[0].mxu0
        %v1953 = vadd.f32 %v1883, %v1952
        %v1954 = vpop.f32.mrb[0].mxu0
        %1955 = vdwg.mxu0
        %v1956 = vadd.f32 %v1811, %v1953
        %1957 = vst [vmem:[#allocation2] sm:$0xff] %v1956
        // Predicated region
        $region53: #{detr_loss_forward.1} parent=43 // pred_check
          %p1958 = pneg %p1806
        $region54: #{detr_loss_forward.1} parent=43 // pred_check_branch
          %1960 = sbr.rel (%p1958) target = $region56
        $region55: #{detr_loss_forward.1} parent=43 // pred_region
          %v1961 = vld [vmem:[%s4] sm:$0x1]
          %v1962 = vld [vmem:[%s317] sm:$0xf]
          %v1963 = vld [vmem:[%s3] sm:$0xf]
          %v1964 = vsub.f32 %v1962, %v1963
          %v1965 = vand.u32 2147483647, %v1964
          %v1967 = vlaneseq
          %v1968 = vshrl.u32 %v1967, 7
          %v1969 = vsub.s32 0, %v1968
          %v1970 = vrot.slane %v1961, %v1969
          %v1972 = vmul.f32 %v1965, %v1970
          %vm1973 = vcmask 1043456
          %v1974 = vsel %vm1973, %v1972, 0.0
          %1975 = vadd.xlane.f32.xlu0 %v1974
          %v1976 = vpop.xlane.xlu0 %1975
          %v1977 = vrot.slane %v1976, 4
          %v1978 = vadd.f32 %v1976, %v1977
          %v1979 = vrot.slane %v1978, 2
          %v1980 = vadd.f32 %v1978, %v1979
          %v1981 = vrot.slane %v1980, 1
          %v1982 = vadd.f32 %v1980, %v1981
          %s1983 = vtos %v1982
          %v1984 = vmul.f32 %v1962, 0.5
          %v1986 = vrot.slane %v1984, 2
          %v1988 = vsub.f32 %v1962, %v1986
          %v1989 = vadd.f32 %v1962, %v1986
          %v1990 = vmul.f32 %v1963, 0.5
          %v1992 = vrot.slane %v1990, 2
          %v1994 = vsub.f32 %v1963, %v1992
          %v1995 = vadd.f32 %v1963, %v1992
          %v1996 = vmin.f32 %v1989, %v1995
          %v1997 = vmax.f32 %v1988, %v1994
          %v1998 = vsub.f32 %v1996, %v1997
          %v1999 = vmax.f32 %v1998, 0.0
          %v2001 = vrot.slane %v1999, 1
          %v2003 = vmul.f32 %v1999, %v2001
          %v2005 = vrot.slane %v1962, 1
          %v2007 = vmul.f32 %v1962, %v2005
          %v2009 = vrot.slane %v1963, 1
          %v2011 = vmul.f32 %v1963, %v2009
          %v2012 = vadd.f32 %v2007, %v2011
          %v2014 = vrot.slane %v2003, 6
          %v2016 = vsub.f32 %v2012, %v2014
          %v2017 = vadd.f32 %v2016, 1e-07
          %v2019 = vrot.slane %v2017, 2
          %v2021 = vrcp.pop %v2019
          %v2022 = vmul.f32 %v2003, %v2021
          %v2023 = vmax.f32 %v1989, %v1995
          %v2024 = vmin.f32 %v1988, %v1994
          %v2025 = vsub.f32 %v2023, %v2024
          %v2027 = vrot.slane %v2025, 1
          %v2029 = vmul.f32 %v2025, %v2027
          %v2030 = vadd.f32 %v2029, 1e-07
          %v2031 = vsub.f32 %v2030, %v2019
          %v2032 = vrcp.pop %v2030
          %v2033 = vmul.f32 %v2031, %v2032
          %v2034 = vsub.f32 %v2022, %v2033
          %v2035 = vsub.f32 1.0, %v2034
          %v2036 = vmul.f32 %v2035, %v1961
          %vm2037 = vcmask 1040384
          %v2038 = vsel %vm2037, %v2036, 0.0
          %2039 = vadd.xlane.f32.xlu0 %v2038
          %v2040 = vpop.xlane.xlu0 %2039
          %v2041 = vrot.slane %v2040, 4
          %v2042 = vadd.f32 %v2040, %v2041
          %v2043 = vrot.slane %v2042, 2
          %v2044 = vadd.f32 %v2042, %v2043
          %v2045 = vrot.slane %v2044, 1
          %v2046 = vadd.f32 %v2044, %v2045
          %s2047 = vtos %v2046
          %v2048 = vld [vmem:[%s313] sm:$0x1]
          %v2049 = vand.u32 2147483647, %v2048
          %v2050 = vsub.f32 0.0, %v2049
          %v2051 = vmul.f32 %v2050, 1.442695
          %v2052 = vpow.pop %v2051
          %v2053 = vmax.f32 %v2048, 0.0
          %v2054 = vadd.f32 %v2052, 1.0
          %v2055 = vlog2.pop %v2054
          %v2056 = vmul.f32 %v2055, 0.6931472
          %v2057 = vmul.f32 -0.5, %v2052
          %v2058 = vadd.f32 %v2057, 1.0
          %v2059 = vmul.f32 %v2058, %v2052
          %v2060 = vand.u32 2147483647, %v2052
          %vm2061 = vcmp.lt.f32.partialorder %v2060, 0.0004427343
          %v2062 = vsel %vm2061, %v2059, %v2056
          %v2063 = vadd.f32 %v2053, %v2062
          %vm2064 = vcmp.ge.f32.partialorder %v2048, 0.0
          %v2065 = vsel %vm2064, 1.0, %v2052
          %v2066 = vadd.f32 %v2052, 1.0
          %v2067 = vrcp.pop %v2066
          %v2068 = vmul.f32 %v2065, %v2067
          %v2069 = vmul.f32 %v2048, %v2022
          %v2070 = vsub.f32 %v2063, %v2069
          %v2071 = vmul.f32 %v2070, %v2022
          %v2072 = vmul.f32 %v2068, %v2068
          %v2073 = vmul.f32 %v2072, 0.75
          %v2074 = vmul.f32 %v2063, %v2073
          %v2075 = vsub.f32 %v2071, %v2074
          %v2076 = vmul.f32 %v2075, %v1961
          %v2077 = vsel %vm2037, %v2076, 0.0
          %2078 = vadd.xlane.f32.xlu0 %v2077
          %v2079 = vpop.xlane.xlu0 %2078
          %v2080 = vrot.slane %v2079, 4
          %v2081 = vadd.f32 %v2079, %v2080
          %v2082 = vrot.slane %v2081, 2
          %v2083 = vadd.f32 %v2081, %v2082
          %v2084 = vrot.slane %v2083, 1
          %v2085 = vadd.f32 %v2083, %v2084
          %s2086 = vtos %v2085
          %v2087 = vld [vmem:[#allocation2] sm:$0x1]
          %v2088 = vsel %vm2037, %v2087, 0.0
          %2089 = vadd.xlane.f32.xlu0 %v2088
          %v2090 = vpop.xlane.xlu0 %2089
          %v2091 = vrot.slane %v2090, 4
          %v2092 = vadd.f32 %v2090, %v2091
          %v2093 = vrot.slane %v2092, 2
          %v2094 = vadd.f32 %v2092, %v2093
          %v2095 = vrot.slane %v2094, 1
          %v2096 = vadd.f32 %v2094, %v2095
          %s2097 = vtos %v2096
          %s2098 = sadd.f32 %s2097, %s2086
          %v2099 = vlaneseq
          %v2100 = vand.u32 %v2099, 127
          %vm2101 = vcmp.eq.s32.totalorder %v2100, 0
          %s2102 = sld [smem:[#allocation3]]
          %s2103 = smul.f32 %s2098, %s2102
          %vm2104 = vcmp.eq.s32.totalorder %v2100, 1
          %s2105 = sld [smem:[#allocation3 + $0x1]]
          %s2106 = smul.f32 %s1983, %s2105
          %vm2107 = vcmp.eq.s32.totalorder %v2100, 2
          %s2108 = sld [smem:[#allocation3 + $0x2]]
          %s2109 = smul.f32 %s2047, %s2108
          %v2110 = vstv %s2109
          %v2111 = vsel %vm2107, %v2110, 0.0
          %v2112 = vstv %s2106
          %v2113 = vsel %vm2104, %v2112, %v2111
          %v2114 = vstv %s2103
          %v2115 = vsel %vm2101, %v2114, %v2113
          %2116 = vst [vmem:[%s320] sm:$0x1] %v2115
        $region56: #{detr_loss_forward.1} parent=43 // pred_fallthru
          _
        %p2117 = scmp.lt.s32.totalorder %s22, 2
        %s2118 = scalar_select %p2117, %s22, 2
        %s2119 = scalar_lea.vmem %s6, %s2118
        // Predicated region
        $region57: #{detr_loss_forward.1} parent=43 // pred_check
          %p2120 = pneg %p191
        $region58: #{detr_loss_forward.1} parent=43 // pred_check_branch
          %2122 = sbr.rel (%p2120) target = $region60
        $region59: #{detr_loss_forward.1} parent=43 // pred_region
          _
        $region60: #{detr_loss_forward.1} parent=43 // pred_fallthru
          _
      $region44: #{detr_loss_forward.1} parent=5 // pred_fallthru
        _
      %p2123 = scmp.le.s32.totalorder 2, %s13
      // Predicated region
      $region61: #{detr_loss_forward.1} parent=5 // pred_check
        %p2124 = pneg %p2123
      $region62: #{detr_loss_forward.1} parent=5 // pred_check_branch
        %2126 = sbr.rel (%p2124) target = $region64
      $region63: #{detr_loss_forward.1} parent=5 // pred_region
        %s2127 = ssub.s32 %s13, 2
        // Predicated region
        $region65: #{detr_loss_forward.1} parent=63 // pred_check
          %p2128 = pneg %p197
        $region66: #{detr_loss_forward.1} parent=63 // pred_check_branch
          %2130 = sbr.rel (%p2128) target = $region68
        $region67: #{detr_loss_forward.1} parent=63 // pred_region
          %p2131 = scmp.lt.s32.totalorder %s24, 2
          %s2132 = scalar_select %p2131, %s24, 2
          %s2133 = scalar_lea.vmem %s6, %s2132
        $region68: #{detr_loss_forward.1} parent=63 // pred_fallthru
          _
      $region64: #{detr_loss_forward.1} parent=5 // pred_fallthru
        _
    $region6: #{detr_loss_forward.1} parent=1 // loop_footer
      %s17 = sadd.s32 1, %s13
    $region7: #{detr_loss_forward.1} parent=1 // loop_footer_branch
      %12 = sbr.rel target = $region3
    $region8: #{detr_loss_forward.1} parent=1 // loop_exit
      _
    %2134 = vsyncpa [#allocation4], 1
    %s2135 = scalar_lea.sflag [#allocation4], 1
    %2136 = vsyncpa %s2135, 1

</llo_original>
